<compile_context>
chip_gen: v7x
topology: tpu7x:2x2x1
jax: 0.10.0
libtpu: 0.0.40
codegen_flags: <defaults>
</compile_context>

<pallas_src>
import functools

import jax
import jax.numpy as jnp
from jax.experimental import pallas as pl
from jax.experimental.pallas import tpu as pltpu

BIG = 100000000000.0
INV_BIG = 1.0 / BIG


def _detect_num_tensorcores():
    """Best-effort TensorCores-per-device count. Correctness never depends on it."""
    try:
        info = pltpu.get_tpu_info()
        for name in ("num_cores", "core_count", "num_tensorcores", "tensorcore_count"):
            n = getattr(info, name, None)
            if n:
                return int(n)
    except Exception:
        pass
    try:
        kind = jax.devices()[0].device_kind.lower()
    except Exception:
        return 1
    if "v7" in kind or "7x" in kind:
        return 2            # v7x: 2 TensorCores per chip
    if "v4" in kind or "v5p" in kind:
        return 2            # megacore
    return 1                # v2/v3/v5e/v6e: single TensorCore per device


def lcde_kernel(x_ref, y0_ref, ekh_ref, wfh_ref, ys_ref,
                y_scr, zbc_scr, ek_scr, wf_scr, dma_sem):
    # x_ref   : (ts_chunk*bg, D1)   raw [1, X] rows, time-major / batch-minor
    # y0_ref  : (bg, H)             init_layer(X[:, 0]) for this batch group
    # ekh_ref : (D1, D1*H)   HBM    broadcast matrix  E_k[k, k*H + j] = 1
    # wfh_ref : (D1*H, H)    HBM    dt * W_flat,  W_flat[k*H+j, i] = W_A[i*H+j, k]
    # ys_ref  : (ts_chunk*bg, H)    outputs for this time chunk
    # y_scr   : (bg, H)  f32        hidden state carried across time chunks
    # zbc_scr : (sub*bg, D1*H) f32  hoisted per-sub-block input broadcast
    # ek_scr / wf_scr               single-buffered VMEM copies of the constants
    bg, _ = y_scr.shape
    d1, d1h = ek_scr.shape
    sub = zbc_scr.shape[0] // bg
    n_sub = x_ref.shape[0] // zbc_scr.shape[0]
    t = pl.program_id(1)

    @pl.when(t == 0)
    def _init():
        # Single-buffer the constants: one DMA per batch group, reused across all
        # time chunks (no per-chunk double-buffered weight traffic).
        cp_ek = pltpu.make_async_copy(ekh_ref, ek_scr, dma_sem.at[0])
        cp_wf = pltpu.make_async_copy(wfh_ref, wf_scr, dma_sem.at[1])
        cp_ek.start()
        cp_wf.start()
        y_scr[...] = y0_ref[...].astype(jnp.float32)
        cp_ek.wait()
        cp_wf.wait()

    def step(j, y, base):
        # Per-step dependent chain: lane-tile y (XLU) -> VPU mul -> one MXU dot
        # -> EUP tanh -> VPU add.  The input broadcast is hoisted (zbc_scr).
        r = pl.multiple_of(j * bg, bg)
        y_bc = jnp.concatenate([y] * d1, axis=-1)                      # (bg, D1*H)
        z = zbc_scr[pl.ds(r, bg), :] * y_bc
        st = jnp.dot(z, wf_scr[...], preferred_element_type=jnp.float32)
        y_new = y + BIG * jnp.tanh(st * INV_BIG)
        out_r = pl.multiple_of((base + j) * bg, bg)
        ys_ref[pl.ds(out_r, bg), :] = y_new.astype(ys_ref.dtype)
        return y_new

    y = y_scr[...]
    for sb in range(n_sub):                      # static sub-block loop
        base = sb * sub
        # Hoisted chunk-level broadcast of the control path (off the serial chain,
        # MXU-efficient M = sub*bg rows): zbc[r, k*H + j] = x[r, k].
        x_blk = x_ref[pl.ds(base * bg, sub * bg), :].astype(jnp.float32)
        zbc_scr[...] = jnp.dot(x_blk, ek_scr[...],
                               preferred_element_type=jnp.float32)
        if sb == 0:
            # Global step 0 carries y0 through unchanged (ys[:, 0] == y0): zero its
            # broadcast rows so the fused update is an exact no-op.
            @pl.when(t == 0)
            def _zero_step0():
                zbc_scr[pl.ds(0, bg), :] = jnp.zeros((bg, d1h), jnp.float32)

        y = jax.lax.fori_loop(0, sub, lambda j, yy: step(j, yy, base), y,
                              unroll=(8 if sub >= 8 else True))
    y_scr[...] = y


def linear_cde_forward(X, w_init_t, b_init, w_a_weight, dt, *,
                       time_chunk=128, sub_block=32, num_cores=None):
    """LinearCDE forward (dense A, fwht=False, rank=0). Returns (B, S, H) float32."""
    B, S, D = X.shape
    H = w_init_t.shape[1]
    D1 = D + 1
    D1H = D1 * H

    # --- step-0 init hoisted out of the kernel (one tiny XLA matmul) ---
    y0 = jnp.dot(X[:, 0, :], w_init_t) + b_init                     # (B, H)

    # --- pad batch to a multiple of 8 sublanes (f32) ---
    b_pad = -(-B // 8) * 8
    if b_pad != B:
        X = jnp.pad(X, ((0, b_pad - B), (0, 0), (0, 0)))
        y0 = jnp.pad(y0, ((0, b_pad - B), (0, 0)))

    # --- batch groups: split only across TensorCores that actually exist ---
    if num_cores is None:
        num_cores = _detect_num_tensorcores()
    nb = 2 if (num_cores >= 2 and b_pad % 16 == 0) else 1
    bg = b_pad // nb

    # --- generation-aware VMEM budget ---
    cap = None
    try:
        cap = getattr(pltpu.get_tpu_info(), "vmem_capacity_bytes", None)
    except Exception:
        cap = None
    if not cap:
        cap = 64 * 1024 * 1024
    vmem_limit = int(min(0.6 * cap, 96 * 1024 * 1024))

    # --- time tiling: ts_chunk = n_sub * sub recurrence steps per grid step ---
    sub = min(sub_block, S)
    if sub < 8:
        sub = S
    while sub > 8 and sub * bg * D1H * 4 > (4 << 20):     # cap broadcast scratch
        sub = max(8, sub // 2)
    n_sub = max(1, min(max(1, time_chunk // sub), -(-S // sub)))
    d1_lanes = -(-D1 // 128) * 128
    h_lanes = -(-H // 128) * 128
    while n_sub > 1 and 2 * n_sub * sub * bg * 4 * (d1_lanes + h_lanes) > vmem_limit // 3:
        n_sub -= 1
    ts_chunk = n_sub * sub
    s_pad = -(-S // ts_chunk) * ts_chunk
    nt = s_pad // ts_chunk

    # --- control path: raw [1, X] (dt folded into the weight), time-major /
    #     batch-minor; zero time-padding rows are exact no-op updates ---
    ones = jnp.ones((b_pad, S, 1), X.dtype)
    inp = jnp.concatenate([ones, X], axis=-1)                       # (b_pad, S, D1)
    inp = inp.reshape(nb, bg, S, D1).transpose(0, 2, 1, 3)          # (nb, S, bg, D1)
    if s_pad != S:
        inp = jnp.pad(inp, ((0, 0), (0, s_pad - S), (0, 0), (0, 0)))
    inp = inp.reshape(nb, s_pad * bg, D1).astype(jnp.float32)

    y0g = y0.reshape(nb, bg, H).astype(jnp.float32)

    # --- fused weight (dt folded in): W_flat[k*H+j, i] = W_A[i*H+j, k] ---
    # w_a_weight has the PyTorch nn.Linear layout (H*H, D1): row i*H+j, col k.
    w_a3 = jnp.transpose(w_a_weight).reshape(D1, H, H)              # [k, i, j]
    w_flat = (jnp.transpose(w_a3, (0, 2, 1)).reshape(D1H, H) * dt).astype(jnp.float32)
    # broadcast matrix: E_k[k, k*H + j] = 1
    e_k = jnp.repeat(jnp.eye(D1, dtype=jnp.float32), H, axis=1)     # (D1, D1H)

    flops = 2 * b_pad * s_pad * D1H * (D1 + H + 1)
    cost = pl.CostEstimate(
        flops=int(flops),
        transcendentals=int(b_pad * s_pad * H),
        bytes_accessed=int(4 * (b_pad * s_pad * (D1 + H) + b_pad * H
                                + nb * (D1 * D1H + D1H * H))))

    ys = pl.pallas_call(
        lcde_kernel,
        out_shape=jax.ShapeDtypeStruct((nb, s_pad * bg, H), jnp.float32),
        grid_spec=pltpu.PrefetchScalarGridSpec(
            num_scalar_prefetch=0,
            grid=(nb, nt),
            in_specs=[
                pl.BlockSpec((None, ts_chunk * bg, D1), lambda g, t: (g, t, 0)),
                pl.BlockSpec((None, bg, H), lambda g, t: (g, 0, 0)),
                pl.BlockSpec(memory_space=pl.ANY),     # E_k        (single-buffered)
                pl.BlockSpec(memory_space=pl.ANY),     # dt*W_flat  (single-buffered)
            ],
            out_specs=pl.BlockSpec((None, ts_chunk * bg, H), lambda g, t: (g, t, 0)),
            scratch_shapes=[
                pltpu.VMEM((bg, H), jnp.float32),          # carried hidden state
                pltpu.VMEM((sub * bg, D1H), jnp.float32),  # hoisted input broadcast
                pltpu.VMEM((D1, D1H), jnp.float32),        # E_k (VMEM copy)
                pltpu.VMEM((D1H, H), jnp.float32),         # dt*W_flat (VMEM copy)
                pltpu.SemaphoreType.DMA((2,)),
            ]),
        compiler_params=pltpu.CompilerParams(
            # batch groups independent (megacore-parallel); time is sequential.
            dimension_semantics=("parallel", "arbitrary"),
            vmem_limit_bytes=vmem_limit),
        cost_estimate=cost,
    )(inp, y0g, e_k, w_flat)

    ys = ys.reshape(nb, s_pad, bg, H).transpose(0, 2, 1, 3).reshape(b_pad, s_pad, H)
    return ys[:B, :S]


def linear_cde_reference(X, w_init_t, b_init, w_a_weight, dt):
    """Pure-JAX reference matching the PyTorch forward exactly."""
    B, S, D = X.shape
    H = w_init_t.shape[1]
    ts = jnp.ones((B, S, 1), X.dtype)
    inp = jnp.concatenate([ts, X], axis=-1) * dt
    y = X[:, 0, :] @ w_init_t + b_init
    ys = [y]
    for i in range(1, S):
        A = (inp[:, i] @ w_a_weight.T).reshape(B, H, H)
        st = jnp.einsum('bij,bj->bi', A, y)
        y = y + BIG * jnp.tanh(st / BIG)
        ys.append(y)
    return jnp.stack(ys, axis=1)


if __name__ == "__main__":
    # Small shapes consistent with the module: (batch, seq, input_dim), hidden_dim.
    B, S, D, H = 4, 8, 4, 32
    D1 = D + 1
    dt = 1.0 / 40
    init_std = 1.0

    key = jax.random.PRNGKey(0)
    k1, k2, k3, k4 = jax.random.split(key, 4)

    X = jax.random.normal(k1, (B, S, D), jnp.float32)
    # init_layer: nn.Linear(input_dim, hidden_dim), weight/bias ~ N(0, init_std)
    w_init_t = jax.random.normal(k2, (D, H), jnp.float32) * init_std    # (in, out)
    b_init = jax.random.normal(k3, (H,), jnp.float32) * init_std
    # vf_A: nn.Linear(D+1, H*H, bias=False), weight (H*H, D+1), std = init_std/sqrt(H).
    # sparsity=1.0 -> mask is a no-op.
    w_a_weight = jax.random.normal(k4, (H * H, D1), jnp.float32) * (init_std / H ** 0.5)

    fwd = jax.jit(functools.partial(linear_cde_forward, dt=dt))
    out = jax.block_until_ready(fwd(X, w_init_t, b_init, w_a_weight))
    ref = linear_cde_reference(X, w_init_t, b_init, w_a_weight, dt)

    assert out.shape == (B, S, H)
    assert jnp.allclose(out, ref, atol=2e-3, rtol=2e-3), \
        float(jnp.max(jnp.abs(out - ref)))
    print("KERNEL_OK")
</pallas_src>

<mosaic_0001>
module attributes {stable_mosaic.version = 11 : i64} {
  func.func @lcde_kernel(%arg0: i32, %arg1: i32, %arg2: memref<1x64x5xf32, #tpu.memory_space<vmem>>, %arg3: memref<1x8x32xf32, #tpu.memory_space<vmem>>, %arg4: memref<5x160xf32, #tpu.memory_space<any>>, %arg5: memref<160x32xf32, #tpu.memory_space<any>>, %arg6: memref<1x64x32xf32, #tpu.memory_space<vmem>>, %arg7: memref<8x32xf32, #tpu.memory_space<vmem>>, %arg8: memref<64x160xf32, #tpu.memory_space<vmem>>, %arg9: memref<5x160xf32, #tpu.memory_space<vmem>>, %arg10: memref<160x32xf32, #tpu.memory_space<vmem>>, %arg11: memref<2x!tpu.dma_semaphore, #tpu.memory_space<semaphore_mem>>) attributes {dimension_semantics = [#tpu.dimension_semantics<parallel>, #tpu.dimension_semantics<arbitrary>], iteration_bounds = array<i64: 1, 1>, scalar_prefetch = 0 : i64, scratch_operands = 5 : i64, tpu.core_type = #tpu.core_type<tc>, window_params = [{transform_indices = @transform_0, window_bounds = array<i64: 1, 64, 5>}, {transform_indices = @transform_1, window_bounds = array<i64: 1, 8, 32>}, {}, {}, {transform_indices = @transform_4, window_bounds = array<i64: 1, 64, 32>}]} {
    %c0_i32 = arith.constant 0 : i32
    %0 = arith.cmpi eq, %arg1, %c0_i32 : i32
    %1 = arith.extui %0 : i1 to i32
    %c0_i32_0 = arith.constant 0 : i32
    %2 = arith.cmpi ne, %1, %c0_i32_0 : i32
    scf.if %2 {
      %c0_i32_102 = arith.constant 0 : i32
      %181 = tpu.memref_slice %arg11[%c0_i32_102] : memref<2x!tpu.dma_semaphore, #tpu.memory_space<semaphore_mem>> -> memref<1x!tpu.dma_semaphore, #tpu.memory_space<semaphore_mem>>
      %182 = tpu.memref_squeeze %181 : memref<1x!tpu.dma_semaphore, #tpu.memory_space<semaphore_mem>> -> memref<!tpu.dma_semaphore, #tpu.memory_space<semaphore_mem>>
      tpu.enqueue_dma source(%arg4 : memref<5x160xf32, #tpu.memory_space<any>>) target(%arg9 : memref<5x160xf32, #tpu.memory_space<vmem>>) target_semaphore(%182 : memref<!tpu.dma_semaphore, #tpu.memory_space<semaphore_mem>>)
      %c1_i32_103 = arith.constant 1 : i32
      %183 = tpu.memref_slice %arg11[%c1_i32_103] : memref<2x!tpu.dma_semaphore, #tpu.memory_space<semaphore_mem>> -> memref<1x!tpu.dma_semaphore, #tpu.memory_space<semaphore_mem>>
      %184 = tpu.memref_squeeze %183 : memref<1x!tpu.dma_semaphore, #tpu.memory_space<semaphore_mem>> -> memref<!tpu.dma_semaphore, #tpu.memory_space<semaphore_mem>>
      tpu.enqueue_dma source(%arg5 : memref<160x32xf32, #tpu.memory_space<any>>) target(%arg10 : memref<160x32xf32, #tpu.memory_space<vmem>>) target_semaphore(%184 : memref<!tpu.dma_semaphore, #tpu.memory_space<semaphore_mem>>)
      %c0_104 = arith.constant 0 : index
      %c0_105 = arith.constant 0 : index
      %c0_106 = arith.constant 0 : index
      %185 = vector.load %arg3[%c0_104, %c0_105, %c0_106] : memref<1x8x32xf32, #tpu.memory_space<vmem>>, vector<1x8x32xf32>
      %186 = vector.shape_cast %185 : vector<1x8x32xf32> to vector<8x32xf32>
      %c0_107 = arith.constant 0 : index
      %c0_108 = arith.constant 0 : index
      %187 = vector.load %arg7[%c0_107, %c0_108] : memref<8x32xf32, #tpu.memory_space<vmem>>, vector<8x32xf32>
      tpu.vector_store %arg7[%c0_107, %c0_108], %186 {strides = array<i32>} : memref<8x32xf32, #tpu.memory_space<vmem>>, vector<8x32xf32>,
      %c0_i32_109 = arith.constant 0 : i32
      %188 = tpu.memref_slice %arg11[%c0_i32_109] : memref<2x!tpu.dma_semaphore, #tpu.memory_space<semaphore_mem>> -> memref<1x!tpu.dma_semaphore, #tpu.memory_space<semaphore_mem>>
      %189 = tpu.memref_squeeze %188 : memref<1x!tpu.dma_semaphore, #tpu.memory_space<semaphore_mem>> -> memref<!tpu.dma_semaphore, #tpu.memory_space<semaphore_mem>>
      tpu.wait_dma2 semaphore(%189 : memref<!tpu.dma_semaphore, #tpu.memory_space<semaphore_mem>>) src(%arg4 : memref<5x160xf32, #tpu.memory_space<any>>) dst(%arg9 : memref<5x160xf32, #tpu.memory_space<vmem>>)
      %c1_i32_110 = arith.constant 1 : i32
      %190 = tpu.memref_slice %arg11[%c1_i32_110] : memref<2x!tpu.dma_semaphore, #tpu.memory_space<semaphore_mem>> -> memref<1x!tpu.dma_semaphore, #tpu.memory_space<semaphore_mem>>
      %191 = tpu.memref_squeeze %190 : memref<1x!tpu.dma_semaphore, #tpu.memory_space<semaphore_mem>> -> memref<!tpu.dma_semaphore, #tpu.memory_space<semaphore_mem>>
      tpu.wait_dma2 semaphore(%191 : memref<!tpu.dma_semaphore, #tpu.memory_space<semaphore_mem>>) src(%arg5 : memref<160x32xf32, #tpu.memory_space<any>>) dst(%arg10 : memref<160x32xf32, #tpu.memory_space<vmem>>)
    } else {
    }
    %c0 = arith.constant 0 : index
    %c0_1 = arith.constant 0 : index
    %3 = vector.load %arg7[%c0, %c0_1] : memref<8x32xf32, #tpu.memory_space<vmem>>, vector<8x32xf32>
    %c0_2 = arith.constant 0 : index
    %c0_3 = arith.constant 0 : index
    %c0_4 = arith.constant 0 : index
    %4 = vector.load %arg2[%c0_2, %c0_3, %c0_4] : memref<1x64x5xf32, #tpu.memory_space<vmem>>, vector<1x64x5xf32>
    %5 = vector.shape_cast %4 : vector<1x64x5xf32> to vector<64x5xf32>
    %c0_5 = arith.constant 0 : index
    %c0_6 = arith.constant 0 : index
    %6 = vector.load %arg9[%c0_5, %c0_6] : memref<5x160xf32, #tpu.memory_space<vmem>>, vector<5x160xf32>
    %cst = arith.constant dense<0.000000e+00> : vector<64x160xf32>
    %7 = tpu.matmul %5, %6, %cst {dimension_numbers = #tpu.dot_dimension_numbers<[1], [0], [0], [1], [0, 0, 1, 1], [], []>} : vector<64x5xf32>, vector<5x160xf32>, vector<64x160xf32> -> vector<64x160xf32>
    %c0_7 = arith.constant 0 : index
    %c0_8 = arith.constant 0 : index
    %8 = vector.load %arg8[%c0_7, %c0_8] : memref<64x160xf32, #tpu.memory_space<vmem>>, vector<64x160xf32>
    tpu.vector_store %arg8[%c0_7, %c0_8], %7 {strides = array<i32>} : memref<64x160xf32, #tpu.memory_space<vmem>>, vector<64x160xf32>,
    %c0_i32_9 = arith.constant 0 : i32
    %9 = arith.cmpi eq, %arg1, %c0_i32_9 : i32
    %10 = arith.extui %9 : i1 to i32
    %c0_i32_10 = arith.constant 0 : i32
    %11 = arith.cmpi ne, %10, %c0_i32_10 : i32
    scf.if %11 {
      %cst_102 = arith.constant 0.000000e+00 : f32
      %181 = vector.broadcast %cst_102 : f32 to vector<8x160xf32>
      %c0_103 = arith.constant 0 : index
      %c0_104 = arith.constant 0 : index
      %182 = vector.load %arg8[%c0_103, %c0_104] : memref<64x160xf32, #tpu.memory_space<vmem>>, vector<8x160xf32>
      tpu.vector_store %arg8[%c0_103, %c0_104], %181 {strides = array<i32>} : memref<64x160xf32, #tpu.memory_space<vmem>>, vector<8x160xf32>,
    } else {
    }
    %c0_i32_11 = arith.constant 0 : i32
    %c8_i32 = arith.constant 8 : i32
    %12 = arith.muli %c0_i32_11, %c8_i32 : i32
    %13 = tpu.assume_multiple %12, 8 : i32
    %14 = tpu.concatenate %3, %3, %3, %3, %3 in 1 : vector<8x32xf32>, vector<8x32xf32>, vector<8x32xf32>, vector<8x32xf32>, vector<8x32xf32> -> vector<8x160xf32>
    %15 = arith.index_cast %13 : i32 to index
    %c0_12 = arith.constant 0 : index
    %16 = vector.load %arg8[%15, %c0_12] : memref<64x160xf32, #tpu.memory_space<vmem>>, vector<8x160xf32>
    %17 = arith.mulf %16, %14 : vector<8x160xf32>
    %c0_13 = arith.constant 0 : index
    %c0_14 = arith.constant 0 : index
    %18 = vector.load %arg10[%c0_13, %c0_14] : memref<160x32xf32, #tpu.memory_space<vmem>>, vector<160x32xf32>
    %cst_15 = arith.constant dense<0.000000e+00> : vector<8x32xf32>
    %19 = tpu.matmul %17, %18, %cst_15 {dimension_numbers = #tpu.dot_dimension_numbers<[1], [0], [0], [1], [0, 0, 1, 1], [], []>} : vector<8x160xf32>, vector<160x32xf32>, vector<8x32xf32> -> vector<8x32xf32>
    %cst_16 = arith.constant 9.99999996E-12 : f32
    %20 = vector.broadcast %cst_16 : f32 to vector<8x32xf32>
    %21 = arith.mulf %19, %20 : vector<8x32xf32>
    %22 = math.tanh %21 : vector<8x32xf32>
    %cst_17 = arith.constant 9.99999979E+10 : f32
    %23 = vector.broadcast %cst_17 : f32 to vector<8x32xf32>
    %24 = arith.mulf %23, %22 : vector<8x32xf32>
    %25 = arith.addf %3, %24 : vector<8x32xf32>
    %c0_i32_18 = arith.constant 0 : i32
    %26 = arith.addi %c0_i32_18, %c0_i32_11 : i32
    %c8_i32_19 = arith.constant 8 : i32
    %27 = arith.muli %26, %c8_i32_19 : i32
    %28 = tpu.assume_multiple %27, 8 : i32
    %c0_20 = arith.constant 0 : index
    %29 = arith.index_cast %28 : i32 to index
    %c0_21 = arith.constant 0 : index
    %30 = vector.load %arg6[%c0_20, %29, %c0_21] : memref<1x64x32xf32, #tpu.memory_space<vmem>>, vector<1x8x32xf32>
    %31 = vector.shape_cast %30 : vector<1x8x32xf32> to vector<8x32xf32>
    %32 = vector.shape_cast %25 : vector<8x32xf32> to vector<1x8x32xf32>
    tpu.vector_store %arg6[%c0_20, %29, %c0_21], %32 {strides = array<i32>} : memref<1x64x32xf32, #tpu.memory_space<vmem>>, vector<1x8x32xf32>,
    %c1_i32 = arith.constant 1 : i32
    %c8_i32_22 = arith.constant 8 : i32
    %33 = arith.muli %c1_i32, %c8_i32_22 : i32
    %34 = tpu.assume_multiple %33, 8 : i32
    %35 = tpu.concatenate %25, %25, %25, %25, %25 in 1 : vector<8x32xf32>, vector<8x32xf32>, vector<8x32xf32>, vector<8x32xf32>, vector<8x32xf32> -> vector<8x160xf32>
    %36 = arith.index_cast %34 : i32 to index
    %c0_23 = arith.constant 0 : index
    %37 = vector.load %arg8[%36, %c0_23] : memref<64x160xf32, #tpu.memory_space<vmem>>, vector<8x160xf32>
    %38 = arith.mulf %37, %35 : vector<8x160xf32>
    %c0_24 = arith.constant 0 : index
    %c0_25 = arith.constant 0 : index
    %39 = vector.load %arg10[%c0_24, %c0_25] : memref<160x32xf32, #tpu.memory_space<vmem>>, vector<160x32xf32>
    %cst_26 = arith.constant dense<0.000000e+00> : vector<8x32xf32>
    %40 = tpu.matmul %38, %39, %cst_26 {dimension_numbers = #tpu.dot_dimension_numbers<[1], [0], [0], [1], [0, 0, 1, 1], [], []>} : vector<8x160xf32>, vector<160x32xf32>, vector<8x32xf32> -> vector<8x32xf32>
    %cst_27 = arith.constant 9.99999996E-12 : f32
    %41 = vector.broadcast %cst_27 : f32 to vector<8x32xf32>
    %42 = arith.mulf %40, %41 : vector<8x32xf32>
    %43 = math.tanh %42 : vector<8x32xf32>
    %cst_28 = arith.constant 9.99999979E+10 : f32
    %44 = vector.broadcast %cst_28 : f32 to vector<8x32xf32>
    %45 = arith.mulf %44, %43 : vector<8x32xf32>
    %46 = arith.addf %25, %45 : vector<8x32xf32>
    %c0_i32_29 = arith.constant 0 : i32
    %47 = arith.addi %c0_i32_29, %c1_i32 : i32
    %c8_i32_30 = arith.constant 8 : i32
    %48 = arith.muli %47, %c8_i32_30 : i32
    %49 = tpu.assume_multiple %48, 8 : i32
    %c0_31 = arith.constant 0 : index
    %50 = arith.index_cast %49 : i32 to index
    %c0_32 = arith.constant 0 : index
    %51 = vector.load %arg6[%c0_31, %50, %c0_32] : memref<1x64x32xf32, #tpu.memory_space<vmem>>, vector<1x8x32xf32>
    %52 = vector.shape_cast %51 : vector<1x8x32xf32> to vector<8x32xf32>
    %53 = vector.shape_cast %46 : vector<8x32xf32> to vector<1x8x32xf32>
    tpu.vector_store %arg6[%c0_31, %50, %c0_32], %53 {strides = array<i32>} : memref<1x64x32xf32, #tpu.memory_space<vmem>>, vector<1x8x32xf32>,
    %c2_i32 = arith.constant 2 : i32
    %c8_i32_33 = arith.constant 8 : i32
    %54 = arith.muli %c2_i32, %c8_i32_33 : i32
    %55 = tpu.assume_multiple %54, 8 : i32
    %56 = tpu.concatenate %46, %46, %46, %46, %46 in 1 : vector<8x32xf32>, vector<8x32xf32>, vector<8x32xf32>, vector<8x32xf32>, vector<8x32xf32> -> vector<8x160xf32>
    %57 = arith.index_cast %55 : i32 to index
    %c0_34 = arith.constant 0 : index
    %58 = vector.load %arg8[%57, %c0_34] : memref<64x160xf32, #tpu.memory_space<vmem>>, vector<8x160xf32>
    %59 = arith.mulf %58, %56 : vector<8x160xf32>
    %c0_35 = arith.constant 0 : index
    %c0_36 = arith.constant 0 : index
    %60 = vector.load %arg10[%c0_35, %c0_36] : memref<160x32xf32, #tpu.memory_space<vmem>>, vector<160x32xf32>
    %cst_37 = arith.constant dense<0.000000e+00> : vector<8x32xf32>
    %61 = tpu.matmul %59, %60, %cst_37 {dimension_numbers = #tpu.dot_dimension_numbers<[1], [0], [0], [1], [0, 0, 1, 1], [], []>} : vector<8x160xf32>, vector<160x32xf32>, vector<8x32xf32> -> vector<8x32xf32>
    %cst_38 = arith.constant 9.99999996E-12 : f32
    %62 = vector.broadcast %cst_38 : f32 to vector<8x32xf32>
    %63 = arith.mulf %61, %62 : vector<8x32xf32>
    %64 = math.tanh %63 : vector<8x32xf32>
    %cst_39 = arith.constant 9.99999979E+10 : f32
    %65 = vector.broadcast %cst_39 : f32 to vector<8x32xf32>
    %66 = arith.mulf %65, %64 : vector<8x32xf32>
    %67 = arith.addf %46, %66 : vector<8x32xf32>
    %c0_i32_40 = arith.constant 0 : i32
    %68 = arith.addi %c0_i32_40, %c2_i32 : i32
    %c8_i32_41 = arith.constant 8 : i32
    %69 = arith.muli %68, %c8_i32_41 : i32
    %70 = tpu.assume_multiple %69, 8 : i32
    %c0_42 = arith.constant 0 : index
    %71 = arith.index_cast %70 : i32 to index
    %c0_43 = arith.constant 0 : index
    %72 = vector.load %arg6[%c0_42, %71, %c0_43] : memref<1x64x32xf32, #tpu.memory_space<vmem>>, vector<1x8x32xf32>
    %73 = vector.shape_cast %72 : vector<1x8x32xf32> to vector<8x32xf32>
    %74 = vector.shape_cast %67 : vector<8x32xf32> to vector<1x8x32xf32>
    tpu.vector_store %arg6[%c0_42, %71, %c0_43], %74 {strides = array<i32>} : memref<1x64x32xf32, #tpu.memory_space<vmem>>, vector<1x8x32xf32>,
    %c3_i32 = arith.constant 3 : i32
    %c8_i32_44 = arith.constant 8 : i32
    %75 = arith.muli %c3_i32, %c8_i32_44 : i32
    %76 = tpu.assume_multiple %75, 8 : i32
    %77 = tpu.concatenate %67, %67, %67, %67, %67 in 1 : vector<8x32xf32>, vector<8x32xf32>, vector<8x32xf32>, vector<8x32xf32>, vector<8x32xf32> -> vector<8x160xf32>
    %78 = arith.index_cast %76 : i32 to index
    %c0_45 = arith.constant 0 : index
    %79 = vector.load %arg8[%78, %c0_45] : memref<64x160xf32, #tpu.memory_space<vmem>>, vector<8x160xf32>
    %80 = arith.mulf %79, %77 : vector<8x160xf32>
    %c0_46 = arith.constant 0 : index
    %c0_47 = arith.constant 0 : index
    %81 = vector.load %arg10[%c0_46, %c0_47] : memref<160x32xf32, #tpu.memory_space<vmem>>, vector<160x32xf32>
    %cst_48 = arith.constant dense<0.000000e+00> : vector<8x32xf32>
    %82 = tpu.matmul %80, %81, %cst_48 {dimension_numbers = #tpu.dot_dimension_numbers<[1], [0], [0], [1], [0, 0, 1, 1], [], []>} : vector<8x160xf32>, vector<160x32xf32>, vector<8x32xf32> -> vector<8x32xf32>
    %cst_49 = arith.constant 9.99999996E-12 : f32
    %83 = vector.broadcast %cst_49 : f32 to vector<8x32xf32>
    %84 = arith.mulf %82, %83 : vector<8x32xf32>
    %85 = math.tanh %84 : vector<8x32xf32>
    %cst_50 = arith.constant 9.99999979E+10 : f32
    %86 = vector.broadcast %cst_50 : f32 to vector<8x32xf32>
    %87 = arith.mulf %86, %85 : vector<8x32xf32>
    %88 = arith.addf %67, %87 : vector<8x32xf32>
    %c0_i32_51 = arith.constant 0 : i32
    %89 = arith.addi %c0_i32_51, %c3_i32 : i32
    %c8_i32_52 = arith.constant 8 : i32
    %90 = arith.muli %89, %c8_i32_52 : i32
    %91 = tpu.assume_multiple %90, 8 : i32
    %c0_53 = arith.constant 0 : index
    %92 = arith.index_cast %91 : i32 to index
    %c0_54 = arith.constant 0 : index
    %93 = vector.load %arg6[%c0_53, %92, %c0_54] : memref<1x64x32xf32, #tpu.memory_space<vmem>>, vector<1x8x32xf32>
    %94 = vector.shape_cast %93 : vector<1x8x32xf32> to vector<8x32xf32>
    %95 = vector.shape_cast %88 : vector<8x32xf32> to vector<1x8x32xf32>
    tpu.vector_store %arg6[%c0_53, %92, %c0_54], %95 {strides = array<i32>} : memref<1x64x32xf32, #tpu.memory_space<vmem>>, vector<1x8x32xf32>,
    %c4_i32 = arith.constant 4 : i32
    %c8_i32_55 = arith.constant 8 : i32
    %96 = arith.muli %c4_i32, %c8_i32_55 : i32
    %97 = tpu.assume_multiple %96, 8 : i32
    %98 = tpu.concatenate %88, %88, %88, %88, %88 in 1 : vector<8x32xf32>, vector<8x32xf32>, vector<8x32xf32>, vector<8x32xf32>, vector<8x32xf32> -> vector<8x160xf32>
    %99 = arith.index_cast %97 : i32 to index
    %c0_56 = arith.constant 0 : index
    %100 = vector.load %arg8[%99, %c0_56] : memref<64x160xf32, #tpu.memory_space<vmem>>, vector<8x160xf32>
    %101 = arith.mulf %100, %98 : vector<8x160xf32>
    %c0_57 = arith.constant 0 : index
    %c0_58 = arith.constant 0 : index
    %102 = vector.load %arg10[%c0_57, %c0_58] : memref<160x32xf32, #tpu.memory_space<vmem>>, vector<160x32xf32>
    %cst_59 = arith.constant dense<0.000000e+00> : vector<8x32xf32>
    %103 = tpu.matmul %101, %102, %cst_59 {dimension_numbers = #tpu.dot_dimension_numbers<[1], [0], [0], [1], [0, 0, 1, 1], [], []>} : vector<8x160xf32>, vector<160x32xf32>, vector<8x32xf32> -> vector<8x32xf32>
    %cst_60 = arith.constant 9.99999996E-12 : f32
    %104 = vector.broadcast %cst_60 : f32 to vector<8x32xf32>
    %105 = arith.mulf %103, %104 : vector<8x32xf32>
    %106 = math.tanh %105 : vector<8x32xf32>
    %cst_61 = arith.constant 9.99999979E+10 : f32
    %107 = vector.broadcast %cst_61 : f32 to vector<8x32xf32>
    %108 = arith.mulf %107, %106 : vector<8x32xf32>
    %109 = arith.addf %88, %108 : vector<8x32xf32>
    %c0_i32_62 = arith.constant 0 : i32
    %110 = arith.addi %c0_i32_62, %c4_i32 : i32
    %c8_i32_63 = arith.constant 8 : i32
    %111 = arith.muli %110, %c8_i32_63 : i32
    %112 = tpu.assume_multiple %111, 8 : i32
    %c0_64 = arith.constant 0 : index
    %113 = arith.index_cast %112 : i32 to index
    %c0_65 = arith.constant 0 : index
    %114 = vector.load %arg6[%c0_64, %113, %c0_65] : memref<1x64x32xf32, #tpu.memory_space<vmem>>, vector<1x8x32xf32>
    %115 = vector.shape_cast %114 : vector<1x8x32xf32> to vector<8x32xf32>
    %116 = vector.shape_cast %109 : vector<8x32xf32> to vector<1x8x32xf32>
    tpu.vector_store %arg6[%c0_64, %113, %c0_65], %116 {strides = array<i32>} : memref<1x64x32xf32, #tpu.memory_space<vmem>>, vector<1x8x32xf32>,
    %c5_i32 = arith.constant 5 : i32
    %c8_i32_66 = arith.constant 8 : i32
    %117 = arith.muli %c5_i32, %c8_i32_66 : i32
    %118 = tpu.assume_multiple %117, 8 : i32
    %119 = tpu.concatenate %109, %109, %109, %109, %109 in 1 : vector<8x32xf32>, vector<8x32xf32>, vector<8x32xf32>, vector<8x32xf32>, vector<8x32xf32> -> vector<8x160xf32>
    %120 = arith.index_cast %118 : i32 to index
    %c0_67 = arith.constant 0 : index
    %121 = vector.load %arg8[%120, %c0_67] : memref<64x160xf32, #tpu.memory_space<vmem>>, vector<8x160xf32>
    %122 = arith.mulf %121, %119 : vector<8x160xf32>
    %c0_68 = arith.constant 0 : index
    %c0_69 = arith.constant 0 : index
    %123 = vector.load %arg10[%c0_68, %c0_69] : memref<160x32xf32, #tpu.memory_space<vmem>>, vector<160x32xf32>
    %cst_70 = arith.constant dense<0.000000e+00> : vector<8x32xf32>
    %124 = tpu.matmul %122, %123, %cst_70 {dimension_numbers = #tpu.dot_dimension_numbers<[1], [0], [0], [1], [0, 0, 1, 1], [], []>} : vector<8x160xf32>, vector<160x32xf32>, vector<8x32xf32> -> vector<8x32xf32>
    %cst_71 = arith.constant 9.99999996E-12 : f32
    %125 = vector.broadcast %cst_71 : f32 to vector<8x32xf32>
    %126 = arith.mulf %124, %125 : vector<8x32xf32>
    %127 = math.tanh %126 : vector<8x32xf32>
    %cst_72 = arith.constant 9.99999979E+10 : f32
    %128 = vector.broadcast %cst_72 : f32 to vector<8x32xf32>
    %129 = arith.mulf %128, %127 : vector<8x32xf32>
    %130 = arith.addf %109, %129 : vector<8x32xf32>
    %c0_i32_73 = arith.constant 0 : i32
    %131 = arith.addi %c0_i32_73, %c5_i32 : i32
    %c8_i32_74 = arith.constant 8 : i32
    %132 = arith.muli %131, %c8_i32_74 : i32
    %133 = tpu.assume_multiple %132, 8 : i32
    %c0_75 = arith.constant 0 : index
    %134 = arith.index_cast %133 : i32 to index
    %c0_76 = arith.constant 0 : index
    %135 = vector.load %arg6[%c0_75, %134, %c0_76] : memref<1x64x32xf32, #tpu.memory_space<vmem>>, vector<1x8x32xf32>
    %136 = vector.shape_cast %135 : vector<1x8x32xf32> to vector<8x32xf32>
    %137 = vector.shape_cast %130 : vector<8x32xf32> to vector<1x8x32xf32>
    tpu.vector_store %arg6[%c0_75, %134, %c0_76], %137 {strides = array<i32>} : memref<1x64x32xf32, #tpu.memory_space<vmem>>, vector<1x8x32xf32>,
    %c6_i32 = arith.constant 6 : i32
    %c8_i32_77 = arith.constant 8 : i32
    %138 = arith.muli %c6_i32, %c8_i32_77 : i32
    %139 = tpu.assume_multiple %138, 8 : i32
    %140 = tpu.concatenate %130, %130, %130, %130, %130 in 1 : vector<8x32xf32>, vector<8x32xf32>, vector<8x32xf32>, vector<8x32xf32>, vector<8x32xf32> -> vector<8x160xf32>
    %141 = arith.index_cast %139 : i32 to index
    %c0_78 = arith.constant 0 : index
    %142 = vector.load %arg8[%141, %c0_78] : memref<64x160xf32, #tpu.memory_space<vmem>>, vector<8x160xf32>
    %143 = arith.mulf %142, %140 : vector<8x160xf32>
    %c0_79 = arith.constant 0 : index
    %c0_80 = arith.constant 0 : index
    %144 = vector.load %arg10[%c0_79, %c0_80] : memref<160x32xf32, #tpu.memory_space<vmem>>, vector<160x32xf32>
    %cst_81 = arith.constant dense<0.000000e+00> : vector<8x32xf32>
    %145 = tpu.matmul %143, %144, %cst_81 {dimension_numbers = #tpu.dot_dimension_numbers<[1], [0], [0], [1], [0, 0, 1, 1], [], []>} : vector<8x160xf32>, vector<160x32xf32>, vector<8x32xf32> -> vector<8x32xf32>
    %cst_82 = arith.constant 9.99999996E-12 : f32
    %146 = vector.broadcast %cst_82 : f32 to vector<8x32xf32>
    %147 = arith.mulf %145, %146 : vector<8x32xf32>
    %148 = math.tanh %147 : vector<8x32xf32>
    %cst_83 = arith.constant 9.99999979E+10 : f32
    %149 = vector.broadcast %cst_83 : f32 to vector<8x32xf32>
    %150 = arith.mulf %149, %148 : vector<8x32xf32>
    %151 = arith.addf %130, %150 : vector<8x32xf32>
    %c0_i32_84 = arith.constant 0 : i32
    %152 = arith.addi %c0_i32_84, %c6_i32 : i32
    %c8_i32_85 = arith.constant 8 : i32
    %153 = arith.muli %152, %c8_i32_85 : i32
    %154 = tpu.assume_multiple %153, 8 : i32
    %c0_86 = arith.constant 0 : index
    %155 = arith.index_cast %154 : i32 to index
    %c0_87 = arith.constant 0 : index
    %156 = vector.load %arg6[%c0_86, %155, %c0_87] : memref<1x64x32xf32, #tpu.memory_space<vmem>>, vector<1x8x32xf32>
    %157 = vector.shape_cast %156 : vector<1x8x32xf32> to vector<8x32xf32>
    %158 = vector.shape_cast %151 : vector<8x32xf32> to vector<1x8x32xf32>
    tpu.vector_store %arg6[%c0_86, %155, %c0_87], %158 {strides = array<i32>} : memref<1x64x32xf32, #tpu.memory_space<vmem>>, vector<1x8x32xf32>,
    %c7_i32 = arith.constant 7 : i32
    %c8_i32_88 = arith.constant 8 : i32
    %159 = arith.muli %c7_i32, %c8_i32_88 : i32
    %160 = tpu.assume_multiple %159, 8 : i32
    %161 = tpu.concatenate %151, %151, %151, %151, %151 in 1 : vector<8x32xf32>, vector<8x32xf32>, vector<8x32xf32>, vector<8x32xf32>, vector<8x32xf32> -> vector<8x160xf32>
    %162 = arith.index_cast %160 : i32 to index
    %c0_89 = arith.constant 0 : index
    %163 = vector.load %arg8[%162, %c0_89] : memref<64x160xf32, #tpu.memory_space<vmem>>, vector<8x160xf32>
    %164 = arith.mulf %163, %161 : vector<8x160xf32>
    %c0_90 = arith.constant 0 : index
    %c0_91 = arith.constant 0 : index
    %165 = vector.load %arg10[%c0_90, %c0_91] : memref<160x32xf32, #tpu.memory_space<vmem>>, vector<160x32xf32>
    %cst_92 = arith.constant dense<0.000000e+00> : vector<8x32xf32>
    %166 = tpu.matmul %164, %165, %cst_92 {dimension_numbers = #tpu.dot_dimension_numbers<[1], [0], [0], [1], [0, 0, 1, 1], [], []>} : vector<8x160xf32>, vector<160x32xf32>, vector<8x32xf32> -> vector<8x32xf32>
    %cst_93 = arith.constant 9.99999996E-12 : f32
    %167 = vector.broadcast %cst_93 : f32 to vector<8x32xf32>
    %168 = arith.mulf %166, %167 : vector<8x32xf32>
    %169 = math.tanh %168 : vector<8x32xf32>
    %cst_94 = arith.constant 9.99999979E+10 : f32
    %170 = vector.broadcast %cst_94 : f32 to vector<8x32xf32>
    %171 = arith.mulf %170, %169 : vector<8x32xf32>
    %172 = arith.addf %151, %171 : vector<8x32xf32>
    %c0_i32_95 = arith.constant 0 : i32
    %173 = arith.addi %c0_i32_95, %c7_i32 : i32
    %c8_i32_96 = arith.constant 8 : i32
    %174 = arith.muli %173, %c8_i32_96 : i32
    %175 = tpu.assume_multiple %174, 8 : i32
    %c0_97 = arith.constant 0 : index
    %176 = arith.index_cast %175 : i32 to index
    %c0_98 = arith.constant 0 : index
    %177 = vector.load %arg6[%c0_97, %176, %c0_98] : memref<1x64x32xf32, #tpu.memory_space<vmem>>, vector<1x8x32xf32>
    %178 = vector.shape_cast %177 : vector<1x8x32xf32> to vector<8x32xf32>
    %179 = vector.shape_cast %172 : vector<8x32xf32> to vector<1x8x32xf32>
    tpu.vector_store %arg6[%c0_97, %176, %c0_98], %179 {strides = array<i32>} : memref<1x64x32xf32, #tpu.memory_space<vmem>>, vector<1x8x32xf32>,
    %c8_i32_99 = arith.constant 8 : i32
    %c0_100 = arith.constant 0 : index
    %c0_101 = arith.constant 0 : index
    %180 = vector.load %arg7[%c0_100, %c0_101] : memref<8x32xf32, #tpu.memory_space<vmem>>, vector<8x32xf32>
    tpu.vector_store %arg7[%c0_100, %c0_101], %172 {strides = array<i32>} : memref<8x32xf32, #tpu.memory_space<vmem>>, vector<8x32xf32>,
    return
  }
  func.func @transform_0(%arg0: i32, %arg1: i32) -> (i32, i32, i32) {
    %c0_i32 = arith.constant 0 : i32
    %c0_i32_0 = arith.constant 0 : i32
    return %arg0, %arg1, %c0_i32 : i32, i32, i32
  }
  func.func @transform_1(%arg0: i32, %arg1: i32) -> (i32, i32, i32) {
    %c0_i32 = arith.constant 0 : i32
    %c0_i32_0 = arith.constant 0 : i32
    %c0_i32_1 = arith.constant 0 : i32
    return %arg0, %c0_i32, %c0_i32_0 : i32, i32, i32
  }
  func.func @transform_4(%arg0: i32, %arg1: i32) -> (i32, i32, i32) {
    %c0_i32 = arith.constant 0 : i32
    %c0_i32_0 = arith.constant 0 : i32
    return %arg0, %arg1, %c0_i32 : i32, i32, i32
  }
}

</mosaic_0001>

<llo_original>
// kernel: linear_cde_forward.1
$region0: #{linear_cde_forward.1}
  #allocation0 [shape = 'u32[]', space=smem, size = 0x4, offset = 0x4, fixed_abs, tag = 'smem constant byte address 0x4 - core index']
  #allocation1 [shape = 'u32[144,128]{1,0:T(1,128)}', space=vmem, size = 0x12000, scoped, tag = 'internal scratch']
  #allocation2 [shape = 'f32[8,32]{1,0:T(8,128)}', space=vmem, size = 0x1000, scoped, tag = 'scratch operand']
  #allocation3 [shape = 'f32[64,160]{1,0:T(8,128)}', space=vmem, size = 0x10000, scoped, tag = 'scratch operand']
  #allocation4 [shape = 'f32[5,160]{1,0:T(8,128)}', space=vmem, size = 0x2000, scoped, tag = 'scratch operand']
  #allocation5 [shape = 'f32[160,32]{1,0:T(8,128)}', space=vmem, size = 0x14000, scoped, tag = 'scratch operand']
  #allocation6 [shape = 's32[2]{0}', space=sflag, size = 0x8, scoped, tag = 'scratch operand']
  #allocation7 [shape = 's32[]', space=sflag, size = 0x4, offset = 0, fixed_abs, tag = 'sflag constant byte address 0x0 - dummy sync flag']
  #allocation8 [shape = 's32[]', space=sflag, size = 0x4, offset = 0, fixed_abs, tag = 'sflag constant byte address 0x0 - dummy sync flag']
  %s0 = inlined_call_operand.vmem [shape: f32[1,64,5], index: 0, kind: input, shape index: {}]
  %s1 = inlined_call_operand.vmem [shape: f32[1,8,32], index: 1, kind: input, shape index: {}]
  %s2 = inlined_call_operand.vmem [shape: f32[5,160], index: 2, kind: input, shape index: {}]
  %s3 = inlined_call_operand.vmem [shape: f32[160,32], index: 3, kind: input, shape index: {}]
  %s4 = inlined_call_operand.vmem [shape: f32[1,64,32], index: 4, kind: output, shape index: {}]
  %s5 = sld [smem:[#allocation0]]
  $region94: #{linear_cde_forward.1} parent=0
    _
  %s7 = ssub.s32 1, %s5
  %s8 = scalar_select 0, %s7, %s5
  // Predicated region
  $region2: #{linear_cde_forward.1} parent=0 // pred_check
    _
  $region3: #{linear_cde_forward.1} parent=0 // pred_check_branch
    %10 = sbr.rel (0) target = $region5
  $region4: #{linear_cde_forward.1} parent=0 // pred_region
    _
  $region5: #{linear_cde_forward.1} parent=0 // pred_fallthru
    _
  // Predicated region
  $region6: #{linear_cde_forward.1} parent=0 // pred_check
    _
  $region7: #{linear_cde_forward.1} parent=0 // pred_check_branch
    %12 = sbr.rel (0) target = $region9
  $region8: #{linear_cde_forward.1} parent=0 // pred_region
    _
  $region9: #{linear_cde_forward.1} parent=0 // pred_fallthru
    _
  %p13 = scmp.eq.s32.totalorder 0, 0
  // Predicated region
  $region10: #{linear_cde_forward.1} parent=0 // pred_check
    %p14 = pneg %p13
  $region11: #{linear_cde_forward.1} parent=0 // pred_check_branch
    %16 = sbr.rel (%p14) target = $region13
  $region12: #{linear_cde_forward.1} parent=0 // pred_region
    %p18 = scmp.lt.u32.totalorder 16, 8
    %p19 = pneg %p18
    // Predicated region
    $region14: #{linear_cde_forward.1} parent=12 // pred_check
      _
    $region15: #{linear_cde_forward.1} parent=12 // pred_check_branch
      %21 = sbr.rel (%p18) target = $region17
    $region16: #{linear_cde_forward.1} parent=12 // pred_region
      %s36 = sand.u32 16, 7
      %p37 = scmp.eq.s32.totalorder %s36, 0
      // Predicated region
      $region29: #{linear_cde_forward.1} parent=16 // pred_check
        %p38 = pneg %p37
      $region30: #{linear_cde_forward.1} parent=16 // pred_check_branch
        %40 = sbr.rel (%p38) target = $region32
      $region31: #{linear_cde_forward.1} parent=16 // pred_region
        loop: start=0, step=1, limit=1
        $region33: #{linear_cde_forward.1} parent=31 // loop_pre_header
          _
        $region34: #{linear_cde_forward.1} parent=31 // loop_header
          %s42 = sphi 0, %s46
          %p43 = scmp.ge.s32.totalorder %s42, 1
          %s47 = sphi %s2, %s2
          %s48 = sphi [#allocation4], [#allocation4]
        $region35: #{linear_cde_forward.1} parent=31 // loop_header_branch
          %45 = sbr.rel (%p43) target = $region39
        $region36: #{linear_cde_forward.1} parent=31 // loop_body
          %v49 = vld [vmem:[%s47] sm:$0xff]
          %50 = vst [vmem:[%s48] sm:$0xff] %v49
          %v51 = vld [vmem:[%s47 + $0x8] sm:$0xff]
          %52 = vst [vmem:[%s48 + $0x8] sm:$0xff] %v51
        $region37: #{linear_cde_forward.1} parent=31 // loop_footer
          %s46 = sadd.s32 1, %s42
        $region38: #{linear_cde_forward.1} parent=31 // loop_footer_branch
          %41 = sbr.rel target = $region34
        $region39: #{linear_cde_forward.1} parent=31 // loop_exit
          _
      $region32: #{linear_cde_forward.1} parent=16 // pred_fallthru
        _
      %p53 = pneg %p37
      // Predicated region
      $region40: #{linear_cde_forward.1} parent=16 // pred_check
        _
      $region41: #{linear_cde_forward.1} parent=16 // pred_check_branch
        %55 = sbr.rel (%p37) target = $region43
      $region42: #{linear_cde_forward.1} parent=16 // pred_region
        %s56 = sand.u32 16, 7
      $region43: #{linear_cde_forward.1} parent=16 // pred_fallthru
        _
    $region17: #{linear_cde_forward.1} parent=12 // pred_fallthru
      _
    // Predicated region
    $region18: #{linear_cde_forward.1} parent=12 // pred_check
      %p22 = pneg %p18
    $region19: #{linear_cde_forward.1} parent=12 // pred_check_branch
      %24 = sbr.rel (%p22) target = $region21
    $region20: #{linear_cde_forward.1} parent=12 // pred_region
      %s25 = sshllo.u32 0, 16
      loop: start=0, step=1, limit=1
      $region22: #{linear_cde_forward.1} parent=20 // loop_pre_header
        _
      $region23: #{linear_cde_forward.1} parent=20 // loop_header
        %s27 = sphi 0, %s31
        %p28 = scmp.ge.s32.totalorder %s27, 1
        %s32 = sphi %s2, %s2
        %s33 = sphi [#allocation4], [#allocation4]
      $region24: #{linear_cde_forward.1} parent=20 // loop_header_branch
        %30 = sbr.rel (%p28) target = $region28
      $region25: #{linear_cde_forward.1} parent=20 // loop_body
        %v34 = vld [vmem:[%s32] sm:%s25]
        %35 = vst [vmem:[%s33] sm:%s25] %v34
      $region26: #{linear_cde_forward.1} parent=20 // loop_footer
        %s31 = sadd.s32 1, %s27
      $region27: #{linear_cde_forward.1} parent=20 // loop_footer_branch
        %26 = sbr.rel target = $region23
      $region28: #{linear_cde_forward.1} parent=20 // loop_exit
        _
    $region21: #{linear_cde_forward.1} parent=12 // pred_fallthru
      _
    // Predicated region
    $region44: #{linear_cde_forward.1} parent=12 // pred_check
      _
    $region45: #{linear_cde_forward.1} parent=12 // pred_check_branch
      %59 = sbr.rel (0) target = $region47
    $region46: #{linear_cde_forward.1} parent=12 // pred_region
      %60 = vsyncadd [#allocation6], 256
    $region47: #{linear_cde_forward.1} parent=12 // pred_fallthru
      _
    %s61 = scalar_lea.sflag [#allocation6], 1
    %p63 = scmp.lt.u32.totalorder 160, 8
    %p64 = pneg %p63
    // Predicated region
    $region48: #{linear_cde_forward.1} parent=12 // pred_check
      _
    $region49: #{linear_cde_forward.1} parent=12 // pred_check_branch
      %66 = sbr.rel (%p63) target = $region51
    $region50: #{linear_cde_forward.1} parent=12 // pred_region
      %s81 = sand.u32 160, 7
      %p82 = scmp.eq.s32.totalorder %s81, 0
      // Predicated region
      $region63: #{linear_cde_forward.1} parent=50 // pred_check
        %p83 = pneg %p82
      $region64: #{linear_cde_forward.1} parent=50 // pred_check_branch
        %85 = sbr.rel (%p83) target = $region66
      $region65: #{linear_cde_forward.1} parent=50 // pred_region
        loop: start=0, step=1, limit=1
        $region67: #{linear_cde_forward.1} parent=65 // loop_pre_header
          _
        $region68: #{linear_cde_forward.1} parent=65 // loop_header
          %s87 = sphi 0, %s91
          %p88 = scmp.ge.s32.totalorder %s87, 1
          %s92 = sphi %s3, %s3
          %s93 = sphi [#allocation5], [#allocation5]
        $region69: #{linear_cde_forward.1} parent=65 // loop_header_branch
          %90 = sbr.rel (%p88) target = $region73
        $region70: #{linear_cde_forward.1} parent=65 // loop_body
          %v94 = vld [vmem:[%s92] sm:$0xff]
          %95 = vst [vmem:[%s93] sm:$0xff] %v94
          %v96 = vld [vmem:[%s92 + $0x8] sm:$0xff]
          %97 = vst [vmem:[%s93 + $0x8] sm:$0xff] %v96
          %v98 = vld [vmem:[%s92 + $0x10] sm:$0xff]
          %99 = vst [vmem:[%s93 + $0x10] sm:$0xff] %v98
          %v100 = vld [vmem:[%s92 + $0x18] sm:$0xff]
          %101 = vst [vmem:[%s93 + $0x18] sm:$0xff] %v100
          %v102 = vld [vmem:[%s92 + $0x20] sm:$0xff]
          %103 = vst [vmem:[%s93 + $0x20] sm:$0xff] %v102
          %v104 = vld [vmem:[%s92 + $0x28] sm:$0xff]
          %105 = vst [vmem:[%s93 + $0x28] sm:$0xff] %v104
          %v106 = vld [vmem:[%s92 + $0x30] sm:$0xff]
          %107 = vst [vmem:[%s93 + $0x30] sm:$0xff] %v106
          %v108 = vld [vmem:[%s92 + $0x38] sm:$0xff]
          %109 = vst [vmem:[%s93 + $0x38] sm:$0xff] %v108
          %v110 = vld [vmem:[%s92 + $0x40] sm:$0xff]
          %111 = vst [vmem:[%s93 + $0x40] sm:$0xff] %v110
          %v112 = vld [vmem:[%s92 + $0x48] sm:$0xff]
          %113 = vst [vmem:[%s93 + $0x48] sm:$0xff] %v112
          %v114 = vld [vmem:[%s92 + $0x50] sm:$0xff]
          %115 = vst [vmem:[%s93 + $0x50] sm:$0xff] %v114
          %v116 = vld [vmem:[%s92 + $0x58] sm:$0xff]
          %117 = vst [vmem:[%s93 + $0x58] sm:$0xff] %v116
          %v118 = vld [vmem:[%s92 + $0x60] sm:$0xff]
          %119 = vst [vmem:[%s93 + $0x60] sm:$0xff] %v118
          %v120 = vld [vmem:[%s92 + $0x68] sm:$0xff]
          %121 = vst [vmem:[%s93 + $0x68] sm:$0xff] %v120
          %v122 = vld [vmem:[%s92 + $0x70] sm:$0xff]
          %123 = vst [vmem:[%s93 + $0x70] sm:$0xff] %v122
          %v124 = vld [vmem:[%s92 + $0x78] sm:$0xff]
          %125 = vst [vmem:[%s93 + $0x78] sm:$0xff] %v124
          %v126 = vld [vmem:[%s92 + $0x80] sm:$0xff]
          %127 = vst [vmem:[%s93 + $0x80] sm:$0xff] %v126
          %v128 = vld [vmem:[%s92 + $0x88] sm:$0xff]
          %129 = vst [vmem:[%s93 + $0x88] sm:$0xff] %v128
          %v130 = vld [vmem:[%s92 + $0x90] sm:$0xff]
          %131 = vst [vmem:[%s93 + $0x90] sm:$0xff] %v130
          %v132 = vld [vmem:[%s92 + $0x98] sm:$0xff]
          %133 = vst [vmem:[%s93 + $0x98] sm:$0xff] %v132
        $region71: #{linear_cde_forward.1} parent=65 // loop_footer
          %s91 = sadd.s32 1, %s87
        $region72: #{linear_cde_forward.1} parent=65 // loop_footer_branch
          %86 = sbr.rel target = $region68
        $region73: #{linear_cde_forward.1} parent=65 // loop_exit
          _
      $region66: #{linear_cde_forward.1} parent=50 // pred_fallthru
        _
      %p134 = pneg %p82
      // Predicated region
      $region74: #{linear_cde_forward.1} parent=50 // pred_check
        _
      $region75: #{linear_cde_forward.1} parent=50 // pred_check_branch
        %136 = sbr.rel (%p82) target = $region77
      $region76: #{linear_cde_forward.1} parent=50 // pred_region
        %s137 = sand.u32 160, 7
      $region77: #{linear_cde_forward.1} parent=50 // pred_fallthru
        _
    $region51: #{linear_cde_forward.1} parent=12 // pred_fallthru
      _
    // Predicated region
    $region52: #{linear_cde_forward.1} parent=12 // pred_check
      %p67 = pneg %p63
    $region53: #{linear_cde_forward.1} parent=12 // pred_check_branch
      %69 = sbr.rel (%p67) target = $region55
    $region54: #{linear_cde_forward.1} parent=12 // pred_region
      %s70 = sshllo.u32 0, 160
      loop: start=0, step=1, limit=1
      $region56: #{linear_cde_forward.1} parent=54 // loop_pre_header
        _
      $region57: #{linear_cde_forward.1} parent=54 // loop_header
        %s72 = sphi 0, %s76
        %p73 = scmp.ge.s32.totalorder %s72, 1
        %s77 = sphi %s3, %s3
        %s78 = sphi [#allocation5], [#allocation5]
      $region58: #{linear_cde_forward.1} parent=54 // loop_header_branch
        %75 = sbr.rel (%p73) target = $region62
      $region59: #{linear_cde_forward.1} parent=54 // loop_body
        %v79 = vld [vmem:[%s77] sm:%s70]
        %80 = vst [vmem:[%s78] sm:%s70] %v79
      $region60: #{linear_cde_forward.1} parent=54 // loop_footer
        %s76 = sadd.s32 1, %s72
      $region61: #{linear_cde_forward.1} parent=54 // loop_footer_branch
        %71 = sbr.rel target = $region57
      $region62: #{linear_cde_forward.1} parent=54 // loop_exit
        _
    $region55: #{linear_cde_forward.1} parent=12 // pred_fallthru
      _
    // Predicated region
    $region78: #{linear_cde_forward.1} parent=12 // pred_check
      _
    $region79: #{linear_cde_forward.1} parent=12 // pred_check_branch
      %140 = sbr.rel (0) target = $region81
    $region80: #{linear_cde_forward.1} parent=12 // pred_region
      %141 = vsyncadd %s61, 2560
    $region81: #{linear_cde_forward.1} parent=12 // pred_fallthru
      _
    %v142 = vld [vmem:[%s1] sm:$0xff]
    %vm143 = vcmask 261120
    %144 = vst.msk [vmem:[#allocation2] sm:$0xff] %vm143, %v142
    %s145 = smul.u32 8, 1
    %s146 = smul.u32 %s145, 2
    %s147 = sshll.u32 %s146, 4
    %148 = dma.done [#allocation6], %s147
    %s149 = smul.u32 160, 1
    %s150 = sshll.u32 %s149, 4
    %151 = dma.done %s61, %s150
  $region13: #{linear_cde_forward.1} parent=0 // pred_fallthru
    _
  %v152 = vld [vmem:[#allocation2] sm:$0xff]
  %v153 = vld [vmem:[%s0] sm:$0xff]
  %v154 = vld [vmem:[%s0 + $0x8] sm:$0xff]
  %v155 = vld [vmem:[%s0 + $0x10] sm:$0xff]
  %v156 = vld [vmem:[%s0 + $0x18] sm:$0xff]
  %v157 = vld [vmem:[%s0 + $0x20] sm:$0xff]
  %v158 = vld [vmem:[%s0 + $0x28] sm:$0xff]
  %v159 = vld [vmem:[%s0 + $0x30] sm:$0xff]
  %v160 = vld [vmem:[%s0 + $0x38] sm:$0xff]
  %v161 = vld [vmem:[#allocation4] sm:$0x1f]
  %v162 = vld [vmem:[#allocation4 + $0x8] sm:$0x1f]
  %vm163 = vcmask 39936
  %v165 = vsel %vm163, %v153, 0
  %v168 = vsel %vm163, %v154, 0
  %v171 = vsel %vm163, %v155, 0
  %v174 = vsel %vm163, %v156, 0
  %v177 = vsel %vm163, %v157, 0
  %v180 = vsel %vm163, %v158, 0
  %v183 = vsel %vm163, %v159, 0
  %v186 = vsel %vm163, %v160, 0
  %vm188 = vcmask 1044480
  %v190 = vsel %vm188, %v161, 0
  %v193 = vsel %vm188, %v162, 0
  %195 = vmatprep.subr.mxu0 %v193
  %196 = vmatpush1.msra.mxu0 %v190
  %197 = vmatprep.subr.mxu0 0.0
  %198 = vmatpush1.msra.mxu0 0.0
  %199 = vmatprep.subr.mxu0 0.0
  %200 = vmatpush1.msra.mxu0 0.0
  %201 = vmatprep.subr.mxu0 0.0
  %202 = vmatpush1.msra.mxu0 0.0
  %203 = vmatprep.subr.mxu0 0.0
  %204 = vmatpush1.msra.mxu0 0.0
  %205 = vmatprep.subr.mxu0 0.0
  %206 = vmatpush1.msra.mxu0 0.0
  %207 = vmatprep.subr.mxu0 0.0
  %208 = vmatpush1.msra.mxu0 0.0
  %209 = vmatprep.subr.mxu0 0.0
  %210 = vmatpush1.msra.mxu0 0.0
  %211 = vmatprep.subr.mxu0 0.0
  %212 = vmatpush1.msra.mxu0 0.0
  %213 = vmatprep.subr.mxu0 0.0
  %214 = vmatpush1.msra.mxu0 0.0
  %215 = vmatprep.subr.mxu0 0.0
  %216 = vmatpush1.msra.mxu0 0.0
  %217 = vmatprep.subr.mxu0 0.0
  %218 = vmatpush1.msra.mxu0 0.0
  %219 = vmatprep.subr.mxu0 0.0
  %220 = vmatpush1.msra.mxu0 0.0
  %221 = vmatprep.subr.mxu0 0.0
  %222 = vmatpush1.msra.mxu0 0.0
  %223 = vmatprep.subr.mxu0 0.0
  %224 = vmatpush1.msra.mxu0 0.0
  %225 = vmatprep.subr.mxu0 0.0
  %226 = vmatpush1.msra.mxu0 0.0
  %227 = vmatprep.subr.mxu0 0.0
  %228 = vmatpush1.msra.mxu0 0.0
  %229 = vmatprep.subr.mxu0 0.0
  %230 = vmatpush1.msra.mxu0 0.0
  %231 = vmatprep.subr.mxu0 0.0
  %232 = vmatpush1.msra.mxu0 0.0
  %233 = vmatprep.subr.mxu0 0.0
  %234 = vmatpush1.msra.mxu0 0.0
  %235 = vmatprep.subr.mxu0 0.0
  %236 = vmatpush1.msra.mxu0 0.0
  %237 = vmatprep.subr.mxu0 0.0
  %238 = vmatpush1.msra.mxu0 0.0
  %239 = vmatprep.subr.mxu0 0.0
  %240 = vmatpush1.msra.mxu0 0.0
  %241 = vmatprep.subr.mxu0 0.0
  %242 = vmatpush1.msra.mxu0 0.0
  %243 = vmatprep.subr.mxu0 0.0
  %244 = vmatpush1.msra.mxu0 0.0
  %245 = vmatprep.subr.mxu0 0.0
  %246 = vmatpush1.msra.mxu0 0.0
  %247 = vmatprep.subr.mxu0 0.0
  %248 = vmatpush1.msra.mxu0 0.0
  %249 = vmatprep.subr.mxu0 0.0
  %250 = vmatpush1.msra.mxu0 0.0
  %251 = vmatprep.subr.mxu0 0.0
  %252 = vmatpush1.msra.mxu0 0.0
  %253 = vmatprep.subr.mxu0 0.0
  %254 = vmatpush1.msra.mxu0 0.0
  %255 = vmatprep.subr.mxu0 0.0
  %256 = vmatpush1.msra.mxu0 0.0
  %257 = vmatprep.subr.mxu0 0.0
  %258 = vmatpush1.msra.mxu0 0.0
  %259 = vmatprep.mubr.f32.mxu0 0.0
  %260 = vmatmul.mubr.f32.gmra.mrb[0].mxu0 %v165
  %v261 = vpop.f32.mrb[0].mxu0
  %v262 = vadd.f32 0.0, %v261
  %v263 = vpop.f32.mrb[0].mxu0
  %v264 = vadd.f32 0.0, %v263
  %265 = vmatprep.mubr.f32.mxu0 0.0
  %266 = vmatmul.mubr.f32.gmra.mrb[0].mxu0 %v168
  %v267 = vpop.f32.mrb[0].mxu0
  %v268 = vadd.f32 0.0, %v267
  %v269 = vpop.f32.mrb[0].mxu0
  %v270 = vadd.f32 0.0, %v269
  %271 = vmatprep.mubr.f32.mxu0 0.0
  %272 = vmatmul.mubr.f32.gmra.mrb[0].mxu0 %v171
  %v273 = vpop.f32.mrb[0].mxu0
  %v274 = vadd.f32 0.0, %v273
  %v275 = vpop.f32.mrb[0].mxu0
  %v276 = vadd.f32 0.0, %v275
  %277 = vmatprep.mubr.f32.mxu0 0.0
  %278 = vmatmul.mubr.f32.gmra.mrb[0].mxu0 %v174
  %v279 = vpop.f32.mrb[0].mxu0
  %v280 = vadd.f32 0.0, %v279
  %v281 = vpop.f32.mrb[0].mxu0
  %v282 = vadd.f32 0.0, %v281
  %283 = vmatprep.mubr.f32.mxu0 0.0
  %284 = vmatmul.mubr.f32.gmra.mrb[0].mxu0 %v177
  %v285 = vpop.f32.mrb[0].mxu0
  %v286 = vadd.f32 0.0, %v285
  %v287 = vpop.f32.mrb[0].mxu0
  %v288 = vadd.f32 0.0, %v287
  %289 = vmatprep.mubr.f32.mxu0 0.0
  %290 = vmatmul.mubr.f32.gmra.mrb[0].mxu0 %v180
  %v291 = vpop.f32.mrb[0].mxu0
  %v292 = vadd.f32 0.0, %v291
  %v293 = vpop.f32.mrb[0].mxu0
  %v294 = vadd.f32 0.0, %v293
  %295 = vmatprep.mubr.f32.mxu0 0.0
  %296 = vmatmul.mubr.f32.gmra.mrb[0].mxu0 %v183
  %v297 = vpop.f32.mrb[0].mxu0
  %v298 = vadd.f32 0.0, %v297
  %v299 = vpop.f32.mrb[0].mxu0
  %v300 = vadd.f32 0.0, %v299
  %301 = vmatprep.mubr.f32.mxu0 0.0
  %302 = vmatmul.mubr.f32.gmra.mrb[0].mxu0 %v186
  %v303 = vpop.f32.mrb[0].mxu0
  %v304 = vadd.f32 0.0, %v303
  %v305 = vpop.f32.mrb[0].mxu0
  %v306 = vadd.f32 0.0, %v305
  %307 = vdwg.mxu0
  %308 = vst [vmem:[#allocation3] sm:$0xff] %v262
  %vm309 = vcmask 261120
  %310 = vst.msk [vmem:[#allocation3 + $0x8] sm:$0xff] %vm309, %v264
  %311 = vst [vmem:[#allocation3 + $0x10] sm:$0xff] %v268
  %312 = vst.msk [vmem:[#allocation3 + $0x18] sm:$0xff] %vm309, %v270
  %313 = vst [vmem:[#allocation3 + $0x20] sm:$0xff] %v274
  %314 = vst.msk [vmem:[#allocation3 + $0x28] sm:$0xff] %vm309, %v276
  %315 = vst [vmem:[#allocation3 + $0x30] sm:$0xff] %v280
  %316 = vst.msk [vmem:[#allocation3 + $0x38] sm:$0xff] %vm309, %v282
  %317 = vst [vmem:[#allocation3 + $0x40] sm:$0xff] %v286
  %318 = vst.msk [vmem:[#allocation3 + $0x48] sm:$0xff] %vm309, %v288
  %319 = vst [vmem:[#allocation3 + $0x50] sm:$0xff] %v292
  %320 = vst.msk [vmem:[#allocation3 + $0x58] sm:$0xff] %vm309, %v294
  %321 = vst [vmem:[#allocation3 + $0x60] sm:$0xff] %v298
  %322 = vst.msk [vmem:[#allocation3 + $0x68] sm:$0xff] %vm309, %v300
  %323 = vst [vmem:[#allocation3 + $0x70] sm:$0xff] %v304
  %324 = vst.msk [vmem:[#allocation3 + $0x78] sm:$0xff] %vm309, %v306
  // Predicated region
  $region82: #{linear_cde_forward.1} parent=0 // pred_check
    %p325 = pneg %p13
  $region83: #{linear_cde_forward.1} parent=0 // pred_check_branch
    %327 = sbr.rel (%p325) target = $region85
  $region84: #{linear_cde_forward.1} parent=0 // pred_region
    %328 = vst [vmem:[#allocation3] sm:$0xff] 0.0
    %329 = vst.msk [vmem:[#allocation3 + $0x8] sm:$0xff] %vm309, 0.0
  $region85: #{linear_cde_forward.1} parent=0 // pred_fallthru
    _
  %331 = vrot.lane.b32.xlu0 %v152, 32
  %v332 = vpop.permute.xlu0 %331
  %334 = vrot.lane.b32.xlu0 %v152, 64
  %v335 = vpop.permute.xlu0 %334
  %337 = vrot.lane.b32.xlu0 %v152, 96
  %v338 = vpop.permute.xlu0 %337
  %v340 = vsel %vm309, %v152, %v332
  %vm341 = vcmask 523264
  %v342 = vsel %vm341, %v340, %v335
  %vm343 = vcmask 785408
  %v344 = vsel %vm343, %v342, %v338
  %s345 = smul.u32 0, 2
  %s346 = smul.addr %s345, 8
  %s347 = scalar_lea.vmem [#allocation3], %s346
  %v348 = vld [vmem:[%s347] sm:$0xff]
  %v349 = vld [vmem:[%s347 + $0x8] sm:$0xff]
  %v350 = vmul.f32 %v348, %v344
  %v351 = vmul.f32 %v349, %v152
  %v352 = vld [vmem:[#allocation5] sm:$0xff]
  %v353 = vld [vmem:[#allocation5 + $0x8] sm:$0xff]
  %v354 = vld [vmem:[#allocation5 + $0x10] sm:$0xff]
  %v355 = vld [vmem:[#allocation5 + $0x18] sm:$0xff]
  %v356 = vld [vmem:[#allocation5 + $0x20] sm:$0xff]
  %v357 = vld [vmem:[#allocation5 + $0x28] sm:$0xff]
  %v358 = vld [vmem:[#allocation5 + $0x30] sm:$0xff]
  %v359 = vld [vmem:[#allocation5 + $0x38] sm:$0xff]
  %v360 = vld [vmem:[#allocation5 + $0x40] sm:$0xff]
  %v361 = vld [vmem:[#allocation5 + $0x48] sm:$0xff]
  %v362 = vld [vmem:[#allocation5 + $0x50] sm:$0xff]
  %v363 = vld [vmem:[#allocation5 + $0x58] sm:$0xff]
  %v364 = vld [vmem:[#allocation5 + $0x60] sm:$0xff]
  %v365 = vld [vmem:[#allocation5 + $0x68] sm:$0xff]
  %v366 = vld [vmem:[#allocation5 + $0x70] sm:$0xff]
  %v367 = vld [vmem:[#allocation5 + $0x78] sm:$0xff]
  %v368 = vld [vmem:[#allocation5 + $0x80] sm:$0xff]
  %v369 = vld [vmem:[#allocation5 + $0x88] sm:$0xff]
  %v370 = vld [vmem:[#allocation5 + $0x90] sm:$0xff]
  %v371 = vld [vmem:[#allocation5 + $0x98] sm:$0xff]
  %v373 = vsel %vm309, %v351, 0
  %375 = vmatprep.subr.mxu0 0.0
  %376 = vmatpush1.msra.mxu0 %v352
  %377 = vmatprep.subr.mxu0 0.0
  %378 = vmatpush1.msra.mxu0 %v353
  %379 = vmatprep.subr.mxu0 0.0
  %380 = vmatpush1.msra.mxu0 %v354
  %381 = vmatprep.subr.mxu0 0.0
  %382 = vmatpush1.msra.mxu0 %v355
  %383 = vmatprep.subr.mxu0 0.0
  %384 = vmatpush1.msra.mxu0 %v356
  %385 = vmatprep.subr.mxu0 0.0
  %386 = vmatpush1.msra.mxu0 %v357
  %387 = vmatprep.subr.mxu0 0.0
  %388 = vmatpush1.msra.mxu0 %v358
  %389 = vmatprep.subr.mxu0 0.0
  %390 = vmatpush1.msra.mxu0 %v359
  %391 = vmatprep.subr.mxu0 0.0
  %392 = vmatpush1.msra.mxu0 %v360
  %393 = vmatprep.subr.mxu0 0.0
  %394 = vmatpush1.msra.mxu0 %v361
  %395 = vmatprep.subr.mxu0 0.0
  %396 = vmatpush1.msra.mxu0 %v362
  %397 = vmatprep.subr.mxu0 0.0
  %398 = vmatpush1.msra.mxu0 %v363
  %399 = vmatprep.subr.mxu0 0.0
  %400 = vmatpush1.msra.mxu0 %v364
  %401 = vmatprep.subr.mxu0 0.0
  %402 = vmatpush1.msra.mxu0 %v365
  %403 = vmatprep.subr.mxu0 0.0
  %404 = vmatpush1.msra.mxu0 %v366
  %405 = vmatprep.subr.mxu0 0.0
  %406 = vmatpush1.msra.mxu0 %v367
  %407 = vmatprep.subr.mxu0 0.0
  %408 = vmatpush1.msra.mxu0 %v368
  %409 = vmatprep.subr.mxu0 0.0
  %410 = vmatpush1.msra.mxu0 %v369
  %411 = vmatprep.subr.mxu0 0.0
  %412 = vmatpush1.msra.mxu0 %v370
  %413 = vmatprep.subr.mxu0 0.0
  %414 = vmatpush1.msra.mxu0 %v371
  %415 = vmatprep.subr.mxu0 0.0
  %416 = vmatpush1.msra.mxu0 0.0
  %417 = vmatprep.subr.mxu0 0.0
  %418 = vmatpush1.msra.mxu0 0.0
  %419 = vmatprep.subr.mxu0 0.0
  %420 = vmatpush1.msra.mxu0 0.0
  %421 = vmatprep.subr.mxu0 0.0
  %422 = vmatpush1.msra.mxu0 0.0
  %423 = vmatprep.subr.mxu0 0.0
  %424 = vmatpush1.msra.mxu0 0.0
  %425 = vmatprep.subr.mxu0 0.0
  %426 = vmatpush1.msra.mxu0 0.0
  %427 = vmatprep.subr.mxu0 0.0
  %428 = vmatpush1.msra.mxu0 0.0
  %429 = vmatprep.subr.mxu0 0.0
  %430 = vmatpush1.msra.mxu0 0.0
  %431 = vmatprep.subr.mxu0 0.0
  %432 = vmatpush1.msra.mxu0 0.0
  %433 = vmatprep.subr.mxu0 0.0
  %434 = vmatpush1.msra.mxu0 0.0
  %435 = vmatprep.subr.mxu0 0.0
  %436 = vmatpush1.msra.mxu0 0.0
  %437 = vmatprep.subr.mxu0 0.0
  %438 = vmatpush1.msra.mxu0 0.0
  %439 = vmatprep.mubr.f32.mxu0 %v373
  %440 = vmatmul.mubr.f32.gmra.mrb[0].mxu0 %v350
  %v441 = vpop.f32.mrb[0].mxu0
  %v442 = vadd.f32 0.0, %v441
  %v443 = vpop.f32.mrb[0].mxu0
  %444 = vdwg.mxu0
  %v445 = vmul.f32 %v442, 1e-11
  %v446 = vtanh.pop %v445
  %v447 = vmul.f32 %v446, 1e+11
  %v448 = vadd.f32 %v152, %v447
  %449 = vst.msk [vmem:[%s4] sm:$0xff] %vm309, %v448
  %451 = vrot.lane.b32.xlu0 %v448, 32
  %v452 = vpop.permute.xlu0 %451
  %454 = vrot.lane.b32.xlu0 %v448, 64
  %v455 = vpop.permute.xlu0 %454
  %457 = vrot.lane.b32.xlu0 %v448, 96
  %v458 = vpop.permute.xlu0 %457
  %v460 = vsel %vm309, %v448, %v452
  %v461 = vsel %vm341, %v460, %v455
  %v462 = vsel %vm343, %v461, %v458
  %s463 = smul.u32 1, 2
  %s464 = smul.addr %s463, 8
  %s465 = scalar_lea.vmem [#allocation3], %s464
  %v466 = vld [vmem:[%s465] sm:$0xff]
  %v467 = vld [vmem:[%s465 + $0x8] sm:$0xff]
  %v468 = vmul.f32 %v466, %v462
  %v469 = vmul.f32 %v467, %v448
  %v470 = vld [vmem:[#allocation5] sm:$0xff]
  %v471 = vld [vmem:[#allocation5 + $0x8] sm:$0xff]
  %v472 = vld [vmem:[#allocation5 + $0x10] sm:$0xff]
  %v473 = vld [vmem:[#allocation5 + $0x18] sm:$0xff]
  %v474 = vld [vmem:[#allocation5 + $0x20] sm:$0xff]
  %v475 = vld [vmem:[#allocation5 + $0x28] sm:$0xff]
  %v476 = vld [vmem:[#allocation5 + $0x30] sm:$0xff]
  %v477 = vld [vmem:[#allocation5 + $0x38] sm:$0xff]
  %v478 = vld [vmem:[#allocation5 + $0x40] sm:$0xff]
  %v479 = vld [vmem:[#allocation5 + $0x48] sm:$0xff]
  %v480 = vld [vmem:[#allocation5 + $0x50] sm:$0xff]
  %v481 = vld [vmem:[#allocation5 + $0x58] sm:$0xff]
  %v482 = vld [vmem:[#allocation5 + $0x60] sm:$0xff]
  %v483 = vld [vmem:[#allocation5 + $0x68] sm:$0xff]
  %v484 = vld [vmem:[#allocation5 + $0x70] sm:$0xff]
  %v485 = vld [vmem:[#allocation5 + $0x78] sm:$0xff]
  %v486 = vld [vmem:[#allocation5 + $0x80] sm:$0xff]
  %v487 = vld [vmem:[#allocation5 + $0x88] sm:$0xff]
  %v488 = vld [vmem:[#allocation5 + $0x90] sm:$0xff]
  %v489 = vld [vmem:[#allocation5 + $0x98] sm:$0xff]
  %v491 = vsel %vm309, %v469, 0
  %493 = vmatprep.subr.mxu0 0.0
  %494 = vmatpush1.msra.mxu0 %v470
  %495 = vmatprep.subr.mxu0 0.0
  %496 = vmatpush1.msra.mxu0 %v471
  %497 = vmatprep.subr.mxu0 0.0
  %498 = vmatpush1.msra.mxu0 %v472
  %499 = vmatprep.subr.mxu0 0.0
  %500 = vmatpush1.msra.mxu0 %v473
  %501 = vmatprep.subr.mxu0 0.0
  %502 = vmatpush1.msra.mxu0 %v474
  %503 = vmatprep.subr.mxu0 0.0
  %504 = vmatpush1.msra.mxu0 %v475
  %505 = vmatprep.subr.mxu0 0.0
  %506 = vmatpush1.msra.mxu0 %v476
  %507 = vmatprep.subr.mxu0 0.0
  %508 = vmatpush1.msra.mxu0 %v477
  %509 = vmatprep.subr.mxu0 0.0
  %510 = vmatpush1.msra.mxu0 %v478
  %511 = vmatprep.subr.mxu0 0.0
  %512 = vmatpush1.msra.mxu0 %v479
  %513 = vmatprep.subr.mxu0 0.0
  %514 = vmatpush1.msra.mxu0 %v480
  %515 = vmatprep.subr.mxu0 0.0
  %516 = vmatpush1.msra.mxu0 %v481
  %517 = vmatprep.subr.mxu0 0.0
  %518 = vmatpush1.msra.mxu0 %v482
  %519 = vmatprep.subr.mxu0 0.0
  %520 = vmatpush1.msra.mxu0 %v483
  %521 = vmatprep.subr.mxu0 0.0
  %522 = vmatpush1.msra.mxu0 %v484
  %523 = vmatprep.subr.mxu0 0.0
  %524 = vmatpush1.msra.mxu0 %v485
  %525 = vmatprep.subr.mxu0 0.0
  %526 = vmatpush1.msra.mxu0 %v486
  %527 = vmatprep.subr.mxu0 0.0
  %528 = vmatpush1.msra.mxu0 %v487
  %529 = vmatprep.subr.mxu0 0.0
  %530 = vmatpush1.msra.mxu0 %v488
  %531 = vmatprep.subr.mxu0 0.0
  %532 = vmatpush1.msra.mxu0 %v489
  %533 = vmatprep.subr.mxu0 0.0
  %534 = vmatpush1.msra.mxu0 0.0
  %535 = vmatprep.subr.mxu0 0.0
  %536 = vmatpush1.msra.mxu0 0.0
  %537 = vmatprep.subr.mxu0 0.0
  %538 = vmatpush1.msra.mxu0 0.0
  %539 = vmatprep.subr.mxu0 0.0
  %540 = vmatpush1.msra.mxu0 0.0
  %541 = vmatprep.subr.mxu0 0.0
  %542 = vmatpush1.msra.mxu0 0.0
  %543 = vmatprep.subr.mxu0 0.0
  %544 = vmatpush1.msra.mxu0 0.0
  %545 = vmatprep.subr.mxu0 0.0
  %546 = vmatpush1.msra.mxu0 0.0
  %547 = vmatprep.subr.mxu0 0.0
  %548 = vmatpush1.msra.mxu0 0.0
  %549 = vmatprep.subr.mxu0 0.0
  %550 = vmatpush1.msra.mxu0 0.0
  %551 = vmatprep.subr.mxu0 0.0
  %552 = vmatpush1.msra.mxu0 0.0
  %553 = vmatprep.subr.mxu0 0.0
  %554 = vmatpush1.msra.mxu0 0.0
  %555 = vmatprep.subr.mxu0 0.0
  %556 = vmatpush1.msra.mxu0 0.0
  %557 = vmatprep.mubr.f32.mxu0 %v491
  %558 = vmatmul.mubr.f32.gmra.mrb[0].mxu0 %v468
  %v559 = vpop.f32.mrb[0].mxu0
  %v560 = vadd.f32 0.0, %v559
  %v561 = vpop.f32.mrb[0].mxu0
  %562 = vdwg.mxu0
  %v563 = vmul.f32 %v560, 1e-11
  %v564 = vtanh.pop %v563
  %v565 = vmul.f32 %v564, 1e+11
  %v566 = vadd.f32 %v448, %v565
  %s567 = scalar_lea.vmem %s4, 8
  %568 = vst.msk [vmem:[%s567] sm:$0xff] %vm309, %v566
  %570 = vrot.lane.b32.xlu0 %v566, 32
  %v571 = vpop.permute.xlu0 %570
  %573 = vrot.lane.b32.xlu0 %v566, 64
  %v574 = vpop.permute.xlu0 %573
  %576 = vrot.lane.b32.xlu0 %v566, 96
  %v577 = vpop.permute.xlu0 %576
  %v579 = vsel %vm309, %v566, %v571
  %v580 = vsel %vm341, %v579, %v574
  %v581 = vsel %vm343, %v580, %v577
  %s582 = smul.u32 2, 2
  %s583 = smul.addr %s582, 8
  %s584 = scalar_lea.vmem [#allocation3], %s583
  %v585 = vld [vmem:[%s584] sm:$0xff]
  %v586 = vld [vmem:[%s584 + $0x8] sm:$0xff]
  %v587 = vmul.f32 %v585, %v581
  %v588 = vmul.f32 %v586, %v566
  %v589 = vld [vmem:[#allocation5] sm:$0xff]
  %v590 = vld [vmem:[#allocation5 + $0x8] sm:$0xff]
  %v591 = vld [vmem:[#allocation5 + $0x10] sm:$0xff]
  %v592 = vld [vmem:[#allocation5 + $0x18] sm:$0xff]
  %v593 = vld [vmem:[#allocation5 + $0x20] sm:$0xff]
  %v594 = vld [vmem:[#allocation5 + $0x28] sm:$0xff]
  %v595 = vld [vmem:[#allocation5 + $0x30] sm:$0xff]
  %v596 = vld [vmem:[#allocation5 + $0x38] sm:$0xff]
  %v597 = vld [vmem:[#allocation5 + $0x40] sm:$0xff]
  %v598 = vld [vmem:[#allocation5 + $0x48] sm:$0xff]
  %v599 = vld [vmem:[#allocation5 + $0x50] sm:$0xff]
  %v600 = vld [vmem:[#allocation5 + $0x58] sm:$0xff]
  %v601 = vld [vmem:[#allocation5 + $0x60] sm:$0xff]
  %v602 = vld [vmem:[#allocation5 + $0x68] sm:$0xff]
  %v603 = vld [vmem:[#allocation5 + $0x70] sm:$0xff]
  %v604 = vld [vmem:[#allocation5 + $0x78] sm:$0xff]
  %v605 = vld [vmem:[#allocation5 + $0x80] sm:$0xff]
  %v606 = vld [vmem:[#allocation5 + $0x88] sm:$0xff]
  %v607 = vld [vmem:[#allocation5 + $0x90] sm:$0xff]
  %v608 = vld [vmem:[#allocation5 + $0x98] sm:$0xff]
  %v610 = vsel %vm309, %v588, 0
  %612 = vmatprep.subr.mxu0 0.0
  %613 = vmatpush1.msra.mxu0 %v589
  %614 = vmatprep.subr.mxu0 0.0
  %615 = vmatpush1.msra.mxu0 %v590
  %616 = vmatprep.subr.mxu0 0.0
  %617 = vmatpush1.msra.mxu0 %v591
  %618 = vmatprep.subr.mxu0 0.0
  %619 = vmatpush1.msra.mxu0 %v592
  %620 = vmatprep.subr.mxu0 0.0
  %621 = vmatpush1.msra.mxu0 %v593
  %622 = vmatprep.subr.mxu0 0.0
  %623 = vmatpush1.msra.mxu0 %v594
  %624 = vmatprep.subr.mxu0 0.0
  %625 = vmatpush1.msra.mxu0 %v595
  %626 = vmatprep.subr.mxu0 0.0
  %627 = vmatpush1.msra.mxu0 %v596
  %628 = vmatprep.subr.mxu0 0.0
  %629 = vmatpush1.msra.mxu0 %v597
  %630 = vmatprep.subr.mxu0 0.0
  %631 = vmatpush1.msra.mxu0 %v598
  %632 = vmatprep.subr.mxu0 0.0
  %633 = vmatpush1.msra.mxu0 %v599
  %634 = vmatprep.subr.mxu0 0.0
  %635 = vmatpush1.msra.mxu0 %v600
  %636 = vmatprep.subr.mxu0 0.0
  %637 = vmatpush1.msra.mxu0 %v601
  %638 = vmatprep.subr.mxu0 0.0
  %639 = vmatpush1.msra.mxu0 %v602
  %640 = vmatprep.subr.mxu0 0.0
  %641 = vmatpush1.msra.mxu0 %v603
  %642 = vmatprep.subr.mxu0 0.0
  %643 = vmatpush1.msra.mxu0 %v604
  %644 = vmatprep.subr.mxu0 0.0
  %645 = vmatpush1.msra.mxu0 %v605
  %646 = vmatprep.subr.mxu0 0.0
  %647 = vmatpush1.msra.mxu0 %v606
  %648 = vmatprep.subr.mxu0 0.0
  %649 = vmatpush1.msra.mxu0 %v607
  %650 = vmatprep.subr.mxu0 0.0
  %651 = vmatpush1.msra.mxu0 %v608
  %652 = vmatprep.subr.mxu0 0.0
  %653 = vmatpush1.msra.mxu0 0.0
  %654 = vmatprep.subr.mxu0 0.0
  %655 = vmatpush1.msra.mxu0 0.0
  %656 = vmatprep.subr.mxu0 0.0
  %657 = vmatpush1.msra.mxu0 0.0
  %658 = vmatprep.subr.mxu0 0.0
  %659 = vmatpush1.msra.mxu0 0.0
  %660 = vmatprep.subr.mxu0 0.0
  %661 = vmatpush1.msra.mxu0 0.0
  %662 = vmatprep.subr.mxu0 0.0
  %663 = vmatpush1.msra.mxu0 0.0
  %664 = vmatprep.subr.mxu0 0.0
  %665 = vmatpush1.msra.mxu0 0.0
  %666 = vmatprep.subr.mxu0 0.0
  %667 = vmatpush1.msra.mxu0 0.0
  %668 = vmatprep.subr.mxu0 0.0
  %669 = vmatpush1.msra.mxu0 0.0
  %670 = vmatprep.subr.mxu0 0.0
  %671 = vmatpush1.msra.mxu0 0.0
  %672 = vmatprep.subr.mxu0 0.0
  %673 = vmatpush1.msra.mxu0 0.0
  %674 = vmatprep.subr.mxu0 0.0
  %675 = vmatpush1.msra.mxu0 0.0
  %676 = vmatprep.mubr.f32.mxu0 %v610
  %677 = vmatmul.mubr.f32.gmra.mrb[0].mxu0 %v587
  %v678 = vpop.f32.mrb[0].mxu0
  %v679 = vadd.f32 0.0, %v678
  %v680 = vpop.f32.mrb[0].mxu0
  %681 = vdwg.mxu0
  %v682 = vmul.f32 %v679, 1e-11
  %v683 = vtanh.pop %v682
  %v684 = vmul.f32 %v683, 1e+11
  %v685 = vadd.f32 %v566, %v684
  %s686 = scalar_lea.vmem %s4, 16
  %687 = vst.msk [vmem:[%s686] sm:$0xff] %vm309, %v685
  %689 = vrot.lane.b32.xlu0 %v685, 32
  %v690 = vpop.permute.xlu0 %689
  %692 = vrot.lane.b32.xlu0 %v685, 64
  %v693 = vpop.permute.xlu0 %692
  %695 = vrot.lane.b32.xlu0 %v685, 96
  %v696 = vpop.permute.xlu0 %695
  %v698 = vsel %vm309, %v685, %v690
  %v699 = vsel %vm341, %v698, %v693
  %v700 = vsel %vm343, %v699, %v696
  %s701 = smul.u32 3, 2
  %s702 = smul.addr %s701, 8
  %s703 = scalar_lea.vmem [#allocation3], %s702
  %v704 = vld [vmem:[%s703] sm:$0xff]
  %v705 = vld [vmem:[%s703 + $0x8] sm:$0xff]
  %v706 = vmul.f32 %v704, %v700
  %v707 = vmul.f32 %v705, %v685
  %v708 = vld [vmem:[#allocation5] sm:$0xff]
  %v709 = vld [vmem:[#allocation5 + $0x8] sm:$0xff]
  %v710 = vld [vmem:[#allocation5 + $0x10] sm:$0xff]
  %v711 = vld [vmem:[#allocation5 + $0x18] sm:$0xff]
  %v712 = vld [vmem:[#allocation5 + $0x20] sm:$0xff]
  %v713 = vld [vmem:[#allocation5 + $0x28] sm:$0xff]
  %v714 = vld [vmem:[#allocation5 + $0x30] sm:$0xff]
  %v715 = vld [vmem:[#allocation5 + $0x38] sm:$0xff]
  %v716 = vld [vmem:[#allocation5 + $0x40] sm:$0xff]
  %v717 = vld [vmem:[#allocation5 + $0x48] sm:$0xff]
  %v718 = vld [vmem:[#allocation5 + $0x50] sm:$0xff]
  %v719 = vld [vmem:[#allocation5 + $0x58] sm:$0xff]
  %v720 = vld [vmem:[#allocation5 + $0x60] sm:$0xff]
  %v721 = vld [vmem:[#allocation5 + $0x68] sm:$0xff]
  %v722 = vld [vmem:[#allocation5 + $0x70] sm:$0xff]
  %v723 = vld [vmem:[#allocation5 + $0x78] sm:$0xff]
  %v724 = vld [vmem:[#allocation5 + $0x80] sm:$0xff]
  %v725 = vld [vmem:[#allocation5 + $0x88] sm:$0xff]
  %v726 = vld [vmem:[#allocation5 + $0x90] sm:$0xff]
  %v727 = vld [vmem:[#allocation5 + $0x98] sm:$0xff]
  %v729 = vsel %vm309, %v707, 0
  %731 = vmatprep.subr.mxu0 0.0
  %732 = vmatpush1.msra.mxu0 %v708
  %733 = vmatprep.subr.mxu0 0.0
  %734 = vmatpush1.msra.mxu0 %v709
  %735 = vmatprep.subr.mxu0 0.0
  %736 = vmatpush1.msra.mxu0 %v710
  %737 = vmatprep.subr.mxu0 0.0
  %738 = vmatpush1.msra.mxu0 %v711
  %739 = vmatprep.subr.mxu0 0.0
  %740 = vmatpush1.msra.mxu0 %v712
  %741 = vmatprep.subr.mxu0 0.0
  %742 = vmatpush1.msra.mxu0 %v713
  %743 = vmatprep.subr.mxu0 0.0
  %744 = vmatpush1.msra.mxu0 %v714
  %745 = vmatprep.subr.mxu0 0.0
  %746 = vmatpush1.msra.mxu0 %v715
  %747 = vmatprep.subr.mxu0 0.0
  %748 = vmatpush1.msra.mxu0 %v716
  %749 = vmatprep.subr.mxu0 0.0
  %750 = vmatpush1.msra.mxu0 %v717
  %751 = vmatprep.subr.mxu0 0.0
  %752 = vmatpush1.msra.mxu0 %v718
  %753 = vmatprep.subr.mxu0 0.0
  %754 = vmatpush1.msra.mxu0 %v719
  %755 = vmatprep.subr.mxu0 0.0
  %756 = vmatpush1.msra.mxu0 %v720
  %757 = vmatprep.subr.mxu0 0.0
  %758 = vmatpush1.msra.mxu0 %v721
  %759 = vmatprep.subr.mxu0 0.0
  %760 = vmatpush1.msra.mxu0 %v722
  %761 = vmatprep.subr.mxu0 0.0
  %762 = vmatpush1.msra.mxu0 %v723
  %763 = vmatprep.subr.mxu0 0.0
  %764 = vmatpush1.msra.mxu0 %v724
  %765 = vmatprep.subr.mxu0 0.0
  %766 = vmatpush1.msra.mxu0 %v725
  %767 = vmatprep.subr.mxu0 0.0
  %768 = vmatpush1.msra.mxu0 %v726
  %769 = vmatprep.subr.mxu0 0.0
  %770 = vmatpush1.msra.mxu0 %v727
  %771 = vmatprep.subr.mxu0 0.0
  %772 = vmatpush1.msra.mxu0 0.0
  %773 = vmatprep.subr.mxu0 0.0
  %774 = vmatpush1.msra.mxu0 0.0
  %775 = vmatprep.subr.mxu0 0.0
  %776 = vmatpush1.msra.mxu0 0.0
  %777 = vmatprep.subr.mxu0 0.0
  %778 = vmatpush1.msra.mxu0 0.0
  %779 = vmatprep.subr.mxu0 0.0
  %780 = vmatpush1.msra.mxu0 0.0
  %781 = vmatprep.subr.mxu0 0.0
  %782 = vmatpush1.msra.mxu0 0.0
  %783 = vmatprep.subr.mxu0 0.0
  %784 = vmatpush1.msra.mxu0 0.0
  %785 = vmatprep.subr.mxu0 0.0
  %786 = vmatpush1.msra.mxu0 0.0
  %787 = vmatprep.subr.mxu0 0.0
  %788 = vmatpush1.msra.mxu0 0.0
  %789 = vmatprep.subr.mxu0 0.0
  %790 = vmatpush1.msra.mxu0 0.0
  %791 = vmatprep.subr.mxu0 0.0
  %792 = vmatpush1.msra.mxu0 0.0
  %793 = vmatprep.subr.mxu0 0.0
  %794 = vmatpush1.msra.mxu0 0.0
  %795 = vmatprep.mubr.f32.mxu0 %v729
  %796 = vmatmul.mubr.f32.gmra.mrb[0].mxu0 %v706
  %v797 = vpop.f32.mrb[0].mxu0
  %v798 = vadd.f32 0.0, %v797
  %v799 = vpop.f32.mrb[0].mxu0
  %800 = vdwg.mxu0
  %v801 = vmul.f32 %v798, 1e-11
  %v802 = vtanh.pop %v801
  %v803 = vmul.f32 %v802, 1e+11
  %v804 = vadd.f32 %v685, %v803
  %s805 = scalar_lea.vmem %s4, 24
  %806 = vst.msk [vmem:[%s805] sm:$0xff] %vm309, %v804
  %808 = vrot.lane.b32.xlu0 %v804, 32
  %v809 = vpop.permute.xlu0 %808
  %811 = vrot.lane.b32.xlu0 %v804, 64
  %v812 = vpop.permute.xlu0 %811
  %814 = vrot.lane.b32.xlu0 %v804, 96
  %v815 = vpop.permute.xlu0 %814
  %v817 = vsel %vm309, %v804, %v809
  %v818 = vsel %vm341, %v817, %v812
  %v819 = vsel %vm343, %v818, %v815
  %s820 = smul.u32 4, 2
  %s821 = smul.addr %s820, 8
  %s822 = scalar_lea.vmem [#allocation3], %s821
  %v823 = vld [vmem:[%s822] sm:$0xff]
  %v824 = vld [vmem:[%s822 + $0x8] sm:$0xff]
  %v825 = vmul.f32 %v823, %v819
  %v826 = vmul.f32 %v824, %v804
  %v827 = vld [vmem:[#allocation5] sm:$0xff]
  %v828 = vld [vmem:[#allocation5 + $0x8] sm:$0xff]
  %v829 = vld [vmem:[#allocation5 + $0x10] sm:$0xff]
  %v830 = vld [vmem:[#allocation5 + $0x18] sm:$0xff]
  %v831 = vld [vmem:[#allocation5 + $0x20] sm:$0xff]
  %v832 = vld [vmem:[#allocation5 + $0x28] sm:$0xff]
  %v833 = vld [vmem:[#allocation5 + $0x30] sm:$0xff]
  %v834 = vld [vmem:[#allocation5 + $0x38] sm:$0xff]
  %v835 = vld [vmem:[#allocation5 + $0x40] sm:$0xff]
  %v836 = vld [vmem:[#allocation5 + $0x48] sm:$0xff]
  %v837 = vld [vmem:[#allocation5 + $0x50] sm:$0xff]
  %v838 = vld [vmem:[#allocation5 + $0x58] sm:$0xff]
  %v839 = vld [vmem:[#allocation5 + $0x60] sm:$0xff]
  %v840 = vld [vmem:[#allocation5 + $0x68] sm:$0xff]
  %v841 = vld [vmem:[#allocation5 + $0x70] sm:$0xff]
  %v842 = vld [vmem:[#allocation5 + $0x78] sm:$0xff]
  %v843 = vld [vmem:[#allocation5 + $0x80] sm:$0xff]
  %v844 = vld [vmem:[#allocation5 + $0x88] sm:$0xff]
  %v845 = vld [vmem:[#allocation5 + $0x90] sm:$0xff]
  %v846 = vld [vmem:[#allocation5 + $0x98] sm:$0xff]
  %v848 = vsel %vm309, %v826, 0
  %850 = vmatprep.subr.mxu0 0.0
  %851 = vmatpush1.msra.mxu0 %v827
  %852 = vmatprep.subr.mxu0 0.0
  %853 = vmatpush1.msra.mxu0 %v828
  %854 = vmatprep.subr.mxu0 0.0
  %855 = vmatpush1.msra.mxu0 %v829
  %856 = vmatprep.subr.mxu0 0.0
  %857 = vmatpush1.msra.mxu0 %v830
  %858 = vmatprep.subr.mxu0 0.0
  %859 = vmatpush1.msra.mxu0 %v831
  %860 = vmatprep.subr.mxu0 0.0
  %861 = vmatpush1.msra.mxu0 %v832
  %862 = vmatprep.subr.mxu0 0.0
  %863 = vmatpush1.msra.mxu0 %v833
  %864 = vmatprep.subr.mxu0 0.0
  %865 = vmatpush1.msra.mxu0 %v834
  %866 = vmatprep.subr.mxu0 0.0
  %867 = vmatpush1.msra.mxu0 %v835
  %868 = vmatprep.subr.mxu0 0.0
  %869 = vmatpush1.msra.mxu0 %v836
  %870 = vmatprep.subr.mxu0 0.0
  %871 = vmatpush1.msra.mxu0 %v837
  %872 = vmatprep.subr.mxu0 0.0
  %873 = vmatpush1.msra.mxu0 %v838
  %874 = vmatprep.subr.mxu0 0.0
  %875 = vmatpush1.msra.mxu0 %v839
  %876 = vmatprep.subr.mxu0 0.0
  %877 = vmatpush1.msra.mxu0 %v840
  %878 = vmatprep.subr.mxu0 0.0
  %879 = vmatpush1.msra.mxu0 %v841
  %880 = vmatprep.subr.mxu0 0.0
  %881 = vmatpush1.msra.mxu0 %v842
  %882 = vmatprep.subr.mxu0 0.0
  %883 = vmatpush1.msra.mxu0 %v843
  %884 = vmatprep.subr.mxu0 0.0
  %885 = vmatpush1.msra.mxu0 %v844
  %886 = vmatprep.subr.mxu0 0.0
  %887 = vmatpush1.msra.mxu0 %v845
  %888 = vmatprep.subr.mxu0 0.0
  %889 = vmatpush1.msra.mxu0 %v846
  %890 = vmatprep.subr.mxu0 0.0
  %891 = vmatpush1.msra.mxu0 0.0
  %892 = vmatprep.subr.mxu0 0.0
  %893 = vmatpush1.msra.mxu0 0.0
  %894 = vmatprep.subr.mxu0 0.0
  %895 = vmatpush1.msra.mxu0 0.0
  %896 = vmatprep.subr.mxu0 0.0
  %897 = vmatpush1.msra.mxu0 0.0
  %898 = vmatprep.subr.mxu0 0.0
  %899 = vmatpush1.msra.mxu0 0.0
  %900 = vmatprep.subr.mxu0 0.0
  %901 = vmatpush1.msra.mxu0 0.0
  %902 = vmatprep.subr.mxu0 0.0
  %903 = vmatpush1.msra.mxu0 0.0
  %904 = vmatprep.subr.mxu0 0.0
  %905 = vmatpush1.msra.mxu0 0.0
  %906 = vmatprep.subr.mxu0 0.0
  %907 = vmatpush1.msra.mxu0 0.0
  %908 = vmatprep.subr.mxu0 0.0
  %909 = vmatpush1.msra.mxu0 0.0
  %910 = vmatprep.subr.mxu0 0.0
  %911 = vmatpush1.msra.mxu0 0.0
  %912 = vmatprep.subr.mxu0 0.0
  %913 = vmatpush1.msra.mxu0 0.0
  %914 = vmatprep.mubr.f32.mxu0 %v848
  %915 = vmatmul.mubr.f32.gmra.mrb[0].mxu0 %v825
  %v916 = vpop.f32.mrb[0].mxu0
  %v917 = vadd.f32 0.0, %v916
  %v918 = vpop.f32.mrb[0].mxu0
  %919 = vdwg.mxu0
  %v920 = vmul.f32 %v917, 1e-11
  %v921 = vtanh.pop %v920
  %v922 = vmul.f32 %v921, 1e+11
  %v923 = vadd.f32 %v804, %v922
  %s924 = scalar_lea.vmem %s4, 32
  %925 = vst.msk [vmem:[%s924] sm:$0xff] %vm309, %v923
  %927 = vrot.lane.b32.xlu0 %v923, 32
  %v928 = vpop.permute.xlu0 %927
  %930 = vrot.lane.b32.xlu0 %v923, 64
  %v931 = vpop.permute.xlu0 %930
  %933 = vrot.lane.b32.xlu0 %v923, 96
  %v934 = vpop.permute.xlu0 %933
  %v936 = vsel %vm309, %v923, %v928
  %v937 = vsel %vm341, %v936, %v931
  %v938 = vsel %vm343, %v937, %v934
  %s939 = smul.u32 5, 2
  %s940 = smul.addr %s939, 8
  %s941 = scalar_lea.vmem [#allocation3], %s940
  %v942 = vld [vmem:[%s941] sm:$0xff]
  %v943 = vld [vmem:[%s941 + $0x8] sm:$0xff]
  %v944 = vmul.f32 %v942, %v938
  %v945 = vmul.f32 %v943, %v923
  %v946 = vld [vmem:[#allocation5] sm:$0xff]
  %v947 = vld [vmem:[#allocation5 + $0x8] sm:$0xff]
  %v948 = vld [vmem:[#allocation5 + $0x10] sm:$0xff]
  %v949 = vld [vmem:[#allocation5 + $0x18] sm:$0xff]
  %v950 = vld [vmem:[#allocation5 + $0x20] sm:$0xff]
  %v951 = vld [vmem:[#allocation5 + $0x28] sm:$0xff]
  %v952 = vld [vmem:[#allocation5 + $0x30] sm:$0xff]
  %v953 = vld [vmem:[#allocation5 + $0x38] sm:$0xff]
  %v954 = vld [vmem:[#allocation5 + $0x40] sm:$0xff]
  %v955 = vld [vmem:[#allocation5 + $0x48] sm:$0xff]
  %v956 = vld [vmem:[#allocation5 + $0x50] sm:$0xff]
  %v957 = vld [vmem:[#allocation5 + $0x58] sm:$0xff]
  %v958 = vld [vmem:[#allocation5 + $0x60] sm:$0xff]
  %v959 = vld [vmem:[#allocation5 + $0x68] sm:$0xff]
  %v960 = vld [vmem:[#allocation5 + $0x70] sm:$0xff]
  %v961 = vld [vmem:[#allocation5 + $0x78] sm:$0xff]
  %v962 = vld [vmem:[#allocation5 + $0x80] sm:$0xff]
  %v963 = vld [vmem:[#allocation5 + $0x88] sm:$0xff]
  %v964 = vld [vmem:[#allocation5 + $0x90] sm:$0xff]
  %v965 = vld [vmem:[#allocation5 + $0x98] sm:$0xff]
  %v967 = vsel %vm309, %v945, 0
  %969 = vmatprep.subr.mxu0 0.0
  %970 = vmatpush1.msra.mxu0 %v946
  %971 = vmatprep.subr.mxu0 0.0
  %972 = vmatpush1.msra.mxu0 %v947
  %973 = vmatprep.subr.mxu0 0.0
  %974 = vmatpush1.msra.mxu0 %v948
  %975 = vmatprep.subr.mxu0 0.0
  %976 = vmatpush1.msra.mxu0 %v949
  %977 = vmatprep.subr.mxu0 0.0
  %978 = vmatpush1.msra.mxu0 %v950
  %979 = vmatprep.subr.mxu0 0.0
  %980 = vmatpush1.msra.mxu0 %v951
  %981 = vmatprep.subr.mxu0 0.0
  %982 = vmatpush1.msra.mxu0 %v952
  %983 = vmatprep.subr.mxu0 0.0
  %984 = vmatpush1.msra.mxu0 %v953
  %985 = vmatprep.subr.mxu0 0.0
  %986 = vmatpush1.msra.mxu0 %v954
  %987 = vmatprep.subr.mxu0 0.0
  %988 = vmatpush1.msra.mxu0 %v955
  %989 = vmatprep.subr.mxu0 0.0
  %990 = vmatpush1.msra.mxu0 %v956
  %991 = vmatprep.subr.mxu0 0.0
  %992 = vmatpush1.msra.mxu0 %v957
  %993 = vmatprep.subr.mxu0 0.0
  %994 = vmatpush1.msra.mxu0 %v958
  %995 = vmatprep.subr.mxu0 0.0
  %996 = vmatpush1.msra.mxu0 %v959
  %997 = vmatprep.subr.mxu0 0.0
  %998 = vmatpush1.msra.mxu0 %v960
  %999 = vmatprep.subr.mxu0 0.0
  %1000 = vmatpush1.msra.mxu0 %v961
  %1001 = vmatprep.subr.mxu0 0.0
  %1002 = vmatpush1.msra.mxu0 %v962
  %1003 = vmatprep.subr.mxu0 0.0
  %1004 = vmatpush1.msra.mxu0 %v963
  %1005 = vmatprep.subr.mxu0 0.0
  %1006 = vmatpush1.msra.mxu0 %v964
  %1007 = vmatprep.subr.mxu0 0.0
  %1008 = vmatpush1.msra.mxu0 %v965
  %1009 = vmatprep.subr.mxu0 0.0
  %1010 = vmatpush1.msra.mxu0 0.0
  %1011 = vmatprep.subr.mxu0 0.0
  %1012 = vmatpush1.msra.mxu0 0.0
  %1013 = vmatprep.subr.mxu0 0.0
  %1014 = vmatpush1.msra.mxu0 0.0
  %1015 = vmatprep.subr.mxu0 0.0
  %1016 = vmatpush1.msra.mxu0 0.0
  %1017 = vmatprep.subr.mxu0 0.0
  %1018 = vmatpush1.msra.mxu0 0.0
  %1019 = vmatprep.subr.mxu0 0.0
  %1020 = vmatpush1.msra.mxu0 0.0
  %1021 = vmatprep.subr.mxu0 0.0
  %1022 = vmatpush1.msra.mxu0 0.0
  %1023 = vmatprep.subr.mxu0 0.0
  %1024 = vmatpush1.msra.mxu0 0.0
  %1025 = vmatprep.subr.mxu0 0.0
  %1026 = vmatpush1.msra.mxu0 0.0
  %1027 = vmatprep.subr.mxu0 0.0
  %1028 = vmatpush1.msra.mxu0 0.0
  %1029 = vmatprep.subr.mxu0 0.0
  %1030 = vmatpush1.msra.mxu0 0.0
  %1031 = vmatprep.subr.mxu0 0.0
  %1032 = vmatpush1.msra.mxu0 0.0
  %1033 = vmatprep.mubr.f32.mxu0 %v967
  %1034 = vmatmul.mubr.f32.gmra.mrb[0].mxu0 %v944
  %v1035 = vpop.f32.mrb[0].mxu0
  %v1036 = vadd.f32 0.0, %v1035
  %v1037 = vpop.f32.mrb[0].mxu0
  %1038 = vdwg.mxu0
  %v1039 = vmul.f32 %v1036, 1e-11
  %v1040 = vtanh.pop %v1039
  %v1041 = vmul.f32 %v1040, 1e+11
  %v1042 = vadd.f32 %v923, %v1041
  %s1043 = scalar_lea.vmem %s4, 40
  %1044 = vst.msk [vmem:[%s1043] sm:$0xff] %vm309, %v1042
  %1046 = vrot.lane.b32.xlu0 %v1042, 32
  %v1047 = vpop.permute.xlu0 %1046
  %1049 = vrot.lane.b32.xlu0 %v1042, 64
  %v1050 = vpop.permute.xlu0 %1049
  %1052 = vrot.lane.b32.xlu0 %v1042, 96
  %v1053 = vpop.permute.xlu0 %1052
  %v1055 = vsel %vm309, %v1042, %v1047
  %v1056 = vsel %vm341, %v1055, %v1050
  %v1057 = vsel %vm343, %v1056, %v1053
  %s1058 = smul.u32 6, 2
  %s1059 = smul.addr %s1058, 8
  %s1060 = scalar_lea.vmem [#allocation3], %s1059
  %v1061 = vld [vmem:[%s1060] sm:$0xff]
  %v1062 = vld [vmem:[%s1060 + $0x8] sm:$0xff]
  %v1063 = vmul.f32 %v1061, %v1057
  %v1064 = vmul.f32 %v1062, %v1042
  %v1065 = vld [vmem:[#allocation5] sm:$0xff]
  %v1066 = vld [vmem:[#allocation5 + $0x8] sm:$0xff]
  %v1067 = vld [vmem:[#allocation5 + $0x10] sm:$0xff]
  %v1068 = vld [vmem:[#allocation5 + $0x18] sm:$0xff]
  %v1069 = vld [vmem:[#allocation5 + $0x20] sm:$0xff]
  %v1070 = vld [vmem:[#allocation5 + $0x28] sm:$0xff]
  %v1071 = vld [vmem:[#allocation5 + $0x30] sm:$0xff]
  %v1072 = vld [vmem:[#allocation5 + $0x38] sm:$0xff]
  %v1073 = vld [vmem:[#allocation5 + $0x40] sm:$0xff]
  %v1074 = vld [vmem:[#allocation5 + $0x48] sm:$0xff]
  %v1075 = vld [vmem:[#allocation5 + $0x50] sm:$0xff]
  %v1076 = vld [vmem:[#allocation5 + $0x58] sm:$0xff]
  %v1077 = vld [vmem:[#allocation5 + $0x60] sm:$0xff]
  %v1078 = vld [vmem:[#allocation5 + $0x68] sm:$0xff]
  %v1079 = vld [vmem:[#allocation5 + $0x70] sm:$0xff]
  %v1080 = vld [vmem:[#allocation5 + $0x78] sm:$0xff]
  %v1081 = vld [vmem:[#allocation5 + $0x80] sm:$0xff]
  %v1082 = vld [vmem:[#allocation5 + $0x88] sm:$0xff]
  %v1083 = vld [vmem:[#allocation5 + $0x90] sm:$0xff]
  %v1084 = vld [vmem:[#allocation5 + $0x98] sm:$0xff]
  %v1086 = vsel %vm309, %v1064, 0
  %1088 = vmatprep.subr.mxu0 0.0
  %1089 = vmatpush1.msra.mxu0 %v1065
  %1090 = vmatprep.subr.mxu0 0.0
  %1091 = vmatpush1.msra.mxu0 %v1066
  %1092 = vmatprep.subr.mxu0 0.0
  %1093 = vmatpush1.msra.mxu0 %v1067
  %1094 = vmatprep.subr.mxu0 0.0
  %1095 = vmatpush1.msra.mxu0 %v1068
  %1096 = vmatprep.subr.mxu0 0.0
  %1097 = vmatpush1.msra.mxu0 %v1069
  %1098 = vmatprep.subr.mxu0 0.0
  %1099 = vmatpush1.msra.mxu0 %v1070
  %1100 = vmatprep.subr.mxu0 0.0
  %1101 = vmatpush1.msra.mxu0 %v1071
  %1102 = vmatprep.subr.mxu0 0.0
  %1103 = vmatpush1.msra.mxu0 %v1072
  %1104 = vmatprep.subr.mxu0 0.0
  %1105 = vmatpush1.msra.mxu0 %v1073
  %1106 = vmatprep.subr.mxu0 0.0
  %1107 = vmatpush1.msra.mxu0 %v1074
  %1108 = vmatprep.subr.mxu0 0.0
  %1109 = vmatpush1.msra.mxu0 %v1075
  %1110 = vmatprep.subr.mxu0 0.0
  %1111 = vmatpush1.msra.mxu0 %v1076
  %1112 = vmatprep.subr.mxu0 0.0
  %1113 = vmatpush1.msra.mxu0 %v1077
  %1114 = vmatprep.subr.mxu0 0.0
  %1115 = vmatpush1.msra.mxu0 %v1078
  %1116 = vmatprep.subr.mxu0 0.0
  %1117 = vmatpush1.msra.mxu0 %v1079
  %1118 = vmatprep.subr.mxu0 0.0
  %1119 = vmatpush1.msra.mxu0 %v1080
  %1120 = vmatprep.subr.mxu0 0.0
  %1121 = vmatpush1.msra.mxu0 %v1081
  %1122 = vmatprep.subr.mxu0 0.0
  %1123 = vmatpush1.msra.mxu0 %v1082
  %1124 = vmatprep.subr.mxu0 0.0
  %1125 = vmatpush1.msra.mxu0 %v1083
  %1126 = vmatprep.subr.mxu0 0.0
  %1127 = vmatpush1.msra.mxu0 %v1084
  %1128 = vmatprep.subr.mxu0 0.0
  %1129 = vmatpush1.msra.mxu0 0.0
  %1130 = vmatprep.subr.mxu0 0.0
  %1131 = vmatpush1.msra.mxu0 0.0
  %1132 = vmatprep.subr.mxu0 0.0
  %1133 = vmatpush1.msra.mxu0 0.0
  %1134 = vmatprep.subr.mxu0 0.0
  %1135 = vmatpush1.msra.mxu0 0.0
  %1136 = vmatprep.subr.mxu0 0.0
  %1137 = vmatpush1.msra.mxu0 0.0
  %1138 = vmatprep.subr.mxu0 0.0
  %1139 = vmatpush1.msra.mxu0 0.0
  %1140 = vmatprep.subr.mxu0 0.0
  %1141 = vmatpush1.msra.mxu0 0.0
  %1142 = vmatprep.subr.mxu0 0.0
  %1143 = vmatpush1.msra.mxu0 0.0
  %1144 = vmatprep.subr.mxu0 0.0
  %1145 = vmatpush1.msra.mxu0 0.0
  %1146 = vmatprep.subr.mxu0 0.0
  %1147 = vmatpush1.msra.mxu0 0.0
  %1148 = vmatprep.subr.mxu0 0.0
  %1149 = vmatpush1.msra.mxu0 0.0
  %1150 = vmatprep.subr.mxu0 0.0
  %1151 = vmatpush1.msra.mxu0 0.0
  %1152 = vmatprep.mubr.f32.mxu0 %v1086
  %1153 = vmatmul.mubr.f32.gmra.mrb[0].mxu0 %v1063
  %v1154 = vpop.f32.mrb[0].mxu0
  %v1155 = vadd.f32 0.0, %v1154
  %v1156 = vpop.f32.mrb[0].mxu0
  %1157 = vdwg.mxu0
  %v1158 = vmul.f32 %v1155, 1e-11
  %v1159 = vtanh.pop %v1158
  %v1160 = vmul.f32 %v1159, 1e+11
  %v1161 = vadd.f32 %v1042, %v1160
  %s1162 = scalar_lea.vmem %s4, 48
  %1163 = vst.msk [vmem:[%s1162] sm:$0xff] %vm309, %v1161
  %1165 = vrot.lane.b32.xlu0 %v1161, 32
  %v1166 = vpop.permute.xlu0 %1165
  %1168 = vrot.lane.b32.xlu0 %v1161, 64
  %v1169 = vpop.permute.xlu0 %1168
  %1171 = vrot.lane.b32.xlu0 %v1161, 96
  %v1172 = vpop.permute.xlu0 %1171
  %v1174 = vsel %vm309, %v1161, %v1166
  %v1175 = vsel %vm341, %v1174, %v1169
  %v1176 = vsel %vm343, %v1175, %v1172
  %s1177 = smul.u32 7, 2
  %s1178 = smul.addr %s1177, 8
  %s1179 = scalar_lea.vmem [#allocation3], %s1178
  %v1180 = vld [vmem:[%s1179] sm:$0xff]
  %v1181 = vld [vmem:[%s1179 + $0x8] sm:$0xff]
  %v1182 = vmul.f32 %v1180, %v1176
  %v1183 = vmul.f32 %v1181, %v1161
  %v1184 = vld [vmem:[#allocation5] sm:$0xff]
  %v1185 = vld [vmem:[#allocation5 + $0x8] sm:$0xff]
  %v1186 = vld [vmem:[#allocation5 + $0x10] sm:$0xff]
  %v1187 = vld [vmem:[#allocation5 + $0x18] sm:$0xff]
  %v1188 = vld [vmem:[#allocation5 + $0x20] sm:$0xff]
  %v1189 = vld [vmem:[#allocation5 + $0x28] sm:$0xff]
  %v1190 = vld [vmem:[#allocation5 + $0x30] sm:$0xff]
  %v1191 = vld [vmem:[#allocation5 + $0x38] sm:$0xff]
  %v1192 = vld [vmem:[#allocation5 + $0x40] sm:$0xff]
  %v1193 = vld [vmem:[#allocation5 + $0x48] sm:$0xff]
  %v1194 = vld [vmem:[#allocation5 + $0x50] sm:$0xff]
  %v1195 = vld [vmem:[#allocation5 + $0x58] sm:$0xff]
  %v1196 = vld [vmem:[#allocation5 + $0x60] sm:$0xff]
  %v1197 = vld [vmem:[#allocation5 + $0x68] sm:$0xff]
  %v1198 = vld [vmem:[#allocation5 + $0x70] sm:$0xff]
  %v1199 = vld [vmem:[#allocation5 + $0x78] sm:$0xff]
  %v1200 = vld [vmem:[#allocation5 + $0x80] sm:$0xff]
  %v1201 = vld [vmem:[#allocation5 + $0x88] sm:$0xff]
  %v1202 = vld [vmem:[#allocation5 + $0x90] sm:$0xff]
  %v1203 = vld [vmem:[#allocation5 + $0x98] sm:$0xff]
  %v1205 = vsel %vm309, %v1183, 0
  %1207 = vmatprep.subr.mxu0 0.0
  %1208 = vmatpush1.msra.mxu0 %v1184
  %1209 = vmatprep.subr.mxu0 0.0
  %1210 = vmatpush1.msra.mxu0 %v1185
  %1211 = vmatprep.subr.mxu0 0.0
  %1212 = vmatpush1.msra.mxu0 %v1186
  %1213 = vmatprep.subr.mxu0 0.0
  %1214 = vmatpush1.msra.mxu0 %v1187
  %1215 = vmatprep.subr.mxu0 0.0
  %1216 = vmatpush1.msra.mxu0 %v1188
  %1217 = vmatprep.subr.mxu0 0.0
  %1218 = vmatpush1.msra.mxu0 %v1189
  %1219 = vmatprep.subr.mxu0 0.0
  %1220 = vmatpush1.msra.mxu0 %v1190
  %1221 = vmatprep.subr.mxu0 0.0
  %1222 = vmatpush1.msra.mxu0 %v1191
  %1223 = vmatprep.subr.mxu0 0.0
  %1224 = vmatpush1.msra.mxu0 %v1192
  %1225 = vmatprep.subr.mxu0 0.0
  %1226 = vmatpush1.msra.mxu0 %v1193
  %1227 = vmatprep.subr.mxu0 0.0
  %1228 = vmatpush1.msra.mxu0 %v1194
  %1229 = vmatprep.subr.mxu0 0.0
  %1230 = vmatpush1.msra.mxu0 %v1195
  %1231 = vmatprep.subr.mxu0 0.0
  %1232 = vmatpush1.msra.mxu0 %v1196
  %1233 = vmatprep.subr.mxu0 0.0
  %1234 = vmatpush1.msra.mxu0 %v1197
  %1235 = vmatprep.subr.mxu0 0.0
  %1236 = vmatpush1.msra.mxu0 %v1198
  %1237 = vmatprep.subr.mxu0 0.0
  %1238 = vmatpush1.msra.mxu0 %v1199
  %1239 = vmatprep.subr.mxu0 0.0
  %1240 = vmatpush1.msra.mxu0 %v1200
  %1241 = vmatprep.subr.mxu0 0.0
  %1242 = vmatpush1.msra.mxu0 %v1201
  %1243 = vmatprep.subr.mxu0 0.0
  %1244 = vmatpush1.msra.mxu0 %v1202
  %1245 = vmatprep.subr.mxu0 0.0
  %1246 = vmatpush1.msra.mxu0 %v1203
  %1247 = vmatprep.subr.mxu0 0.0
  %1248 = vmatpush1.msra.mxu0 0.0
  %1249 = vmatprep.subr.mxu0 0.0
  %1250 = vmatpush1.msra.mxu0 0.0
  %1251 = vmatprep.subr.mxu0 0.0
  %1252 = vmatpush1.msra.mxu0 0.0
  %1253 = vmatprep.subr.mxu0 0.0
  %1254 = vmatpush1.msra.mxu0 0.0
  %1255 = vmatprep.subr.mxu0 0.0
  %1256 = vmatpush1.msra.mxu0 0.0
  %1257 = vmatprep.subr.mxu0 0.0
  %1258 = vmatpush1.msra.mxu0 0.0
  %1259 = vmatprep.subr.mxu0 0.0
  %1260 = vmatpush1.msra.mxu0 0.0
  %1261 = vmatprep.subr.mxu0 0.0
  %1262 = vmatpush1.msra.mxu0 0.0
  %1263 = vmatprep.subr.mxu0 0.0
  %1264 = vmatpush1.msra.mxu0 0.0
  %1265 = vmatprep.subr.mxu0 0.0
  %1266 = vmatpush1.msra.mxu0 0.0
  %1267 = vmatprep.subr.mxu0 0.0
  %1268 = vmatpush1.msra.mxu0 0.0
  %1269 = vmatprep.subr.mxu0 0.0
  %1270 = vmatpush1.msra.mxu0 0.0
  %1271 = vmatprep.mubr.f32.mxu0 %v1205
  %1272 = vmatmul.mubr.f32.gmra.mrb[0].mxu0 %v1182
  %v1273 = vpop.f32.mrb[0].mxu0
  %v1274 = vadd.f32 0.0, %v1273
  %v1275 = vpop.f32.mrb[0].mxu0
  %1276 = vdwg.mxu0
  %v1277 = vmul.f32 %v1274, 1e-11
  %v1278 = vtanh.pop %v1277
  %v1279 = vmul.f32 %v1278, 1e+11
  %v1280 = vadd.f32 %v1161, %v1279
  %s1281 = scalar_lea.vmem %s4, 56
  %1282 = vst.msk [vmem:[%s1281] sm:$0xff] %vm309, %v1280
  %1283 = vst.msk [vmem:[#allocation2] sm:$0xff] %vm309, %v1280
  // Predicated region
  $region86: #{linear_cde_forward.1} parent=0 // pred_check
    _
  $region87: #{linear_cde_forward.1} parent=0 // pred_check_branch
    %1285 = sbr.rel (0) target = $region89
  $region88: #{linear_cde_forward.1} parent=0 // pred_region
    _
  $region89: #{linear_cde_forward.1} parent=0 // pred_fallthru
    _
  // Predicated region
  $region90: #{linear_cde_forward.1} parent=0 // pred_check
    _
  $region91: #{linear_cde_forward.1} parent=0 // pred_check_branch
    %1287 = sbr.rel (0) target = $region93
  $region92: #{linear_cde_forward.1} parent=0 // pred_region
    _
  $region93: #{linear_cde_forward.1} parent=0 // pred_fallthru
    _
  %1288 = vsyncmov [#allocation6]
  %s1289 = vpop.sfrf %1288
  %p1290 = scmp.eq.s32.totalorder %s1289, 0
  %p1291 = pneg %p1290
  %1293 = shalt.err (%p1291)
  %s1294 = scalar_lea.sflag [#allocation6], 1
  %1295 = vsyncmov %s1294
  %s1296 = vpop.sfrf %1295
  %p1297 = scmp.eq.s32.totalorder %s1296, 0
  %p1298 = pneg %p1297
  %1300 = shalt.err (%p1298)

</llo_original>
